<compile_context>
chip_gen: v7x
topology: tpu7x:2x2x1
jax: 0.10.0
libtpu: 0.0.40
codegen_flags: <defaults>
</compile_context>

<pallas_src>
import functools

import jax
import jax.numpy as jnp
from jax.experimental import pallas as pl
from jax.experimental.pallas import tpu as pltpu

BN_EPS = 1e-3  # torchvision EfficientNet uses BatchNorm2d(eps=1e-3)
MB = 1024 * 1024

# (expand_ratio, kernel, stride, in_ch, out_ch, repeats) -- EfficientNet-B0 stages
MBCONV_CFG = [
    (1, 3, 1, 32, 16, 1),
    (6, 3, 2, 16, 24, 2),
    (6, 5, 2, 24, 40, 2),
    (6, 3, 2, 40, 80, 3),
    (6, 5, 1, 80, 112, 3),
    (6, 5, 2, 112, 192, 4),
    (6, 3, 1, 192, 320, 1),
]


def _round_up(x, m):
    return (x + m - 1) // m * m


@functools.lru_cache(maxsize=None)
def _gen_config():
    """Generation-aware VMEM limit and tile caps (review: split v5e/v6e vs v7x)."""
    kind = ""
    try:
        kind = jax.devices()[0].device_kind.lower()
    except Exception:
        pass
    if "v7" in kind or "7x" in kind:
        # 64 MiB VMEM / TC, 2 TCs: keep scoped limit small, modest tiles.
        return {"name": "v7x", "vmem": 32 * MB, "tm": 512, "thw": 512, "dw_budget": 3 * MB}
    if "v6" in kind:
        return {"name": "v6e", "vmem": 96 * MB, "tm": 1024, "thw": 1024, "dw_budget": 8 * MB}
    if "v5" in kind:
        return {"name": "v5e", "vmem": 64 * MB, "tm": 1024, "thw": 1024, "dw_budget": 8 * MB}
    if "v2" in kind or "v3" in kind:
        return {"name": "v2/v3", "vmem": 14 * MB, "tm": 256, "thw": 256, "dw_budget": 1 * MB}
    return {"name": "default", "vmem": 32 * MB, "tm": 512, "thw": 512, "dw_budget": 3 * MB}


def _act(y, act):
    if act == "none":
        return y
    if act == "relu":
        return jnp.maximum(y, 0.0)
    if act == "silu":
        return y * jax.nn.sigmoid(y)
    if act == "sigmoid":
        return jax.nn.sigmoid(y)
    if act == "tanh":
        return jnp.tanh(y)
    raise ValueError(act)


def _pad_cexp(c):
    # Pad expanded channels >128 to the next 128-multiple (full-vreg tap FMAs and
    # lane-dense stores) only when the inflation is small (<=1.25x): pads 240/480/672,
    # leaves 96/144 alone.
    if c > 128 and c % 128 != 0:
        cp = _round_up(c, 128)
        if cp <= int(c * 1.25):
            return cp
    return c


def _pad_cout(c):
    # Lane-dense project-conv stores for Cout in {80,112,192,320}; the zero channels are
    # carried through the trunk (consumer weights get zero rows), never sliced back.
    if c >= 64 and c % 128 != 0:
        return _round_up(c, 128)
    return c


# ----------------------------------------------------------------------------
# Pallas kernels
# ----------------------------------------------------------------------------
def _matmul_kernel(a_ref, b_ref, bias_ref, o_ref, *, act):
    # bf16 operands on the MXU, f32 accumulation + f32 epilogue.
    y = jnp.dot(a_ref[...], b_ref[...], preferred_element_type=jnp.float32)
    y = y + bias_ref[...]
    o_ref[...] = _act(y, act).astype(o_ref.dtype)


def matmul_bias_act(a, b, bias, act="none", out_dtype=jnp.bfloat16):
    """y = act(a @ b + bias).  a:(M,K) b:(K,N) bias:(N,). Tiled over M (and N when large)."""
    cfg = _gen_config()
    M, K = a.shape
    N = b.shape[1]
    a = a.astype(jnp.bfloat16)
    b = b.astype(jnp.bfloat16)
    # Pad the contraction dim to a packing-friendly multiple (zeros are inert); stem 27->32.
    kp = _round_up(K, 16)
    if kp != K:
        a = jnp.pad(a, ((0, 0), (0, kp - K)))
        b = jnp.pad(b, ((0, kp - K), (0, 0)))
        K = kp
    mp = _round_up(M, 16)
    tm = min(cfg["tm"], mp)
    mp = _round_up(mp, tm)
    if mp != M:
        a = jnp.pad(a, ((0, mp - M), (0, 0)))
    # Tile the output dim for large N: bounds the (tm, tn) f32 intermediate and gives
    # >=2 grid steps so both v7x TensorCores get work on the wide head/expand convs.
    tn = N
    if N > 512:
        for cand in (512, 384, 256, 128):
            if N % cand == 0:
                tn = cand
                break
    out = pl.pallas_call(
        functools.partial(_matmul_kernel, act=act),
        out_shape=jax.ShapeDtypeStruct((mp, N), out_dtype),
        grid_spec=pltpu.PrefetchScalarGridSpec(
            num_scalar_prefetch=0,
            grid=(mp // tm, N // tn),
            in_specs=[
                pl.BlockSpec((tm, K), lambda i, j: (i, 0)),
                # TODO(synk): pl.Buffered(1) on these constant-index specs would halve the
                # weight-buffer footprint on v7x; kept at defaults for portability.
                pl.BlockSpec((K, tn), lambda i, j: (0, j)),
                pl.BlockSpec((1, tn), lambda i, j: (0, j)),
            ],
            out_specs=pl.BlockSpec((tm, tn), lambda i, j: (i, j)),
        ),
        compiler_params=pltpu.CompilerParams(
            dimension_semantics=("parallel", "parallel"),
            vmem_limit_bytes=cfg["vmem"],
        ),
    )(a, b, bias.reshape(1, N).astype(jnp.float32))
    return out[:M] if mp != M else out


def _dwconv_se_kernel(p_ref, w_ref, b_ref, o_ref, pool_ref, *, k, stride, inv_hw):
    # p_ref:(S*S, 1, Hq, Wq, C) phase-decomposed padded input (bf16, VMEM-resident per n)
    # o_ref:(1, tr, Wo, C) dwconv+BN+SiLU rows;  pool_ref:(1,1,C) fused SE spatial-mean.
    r = pl.program_id(1)
    _, TR, Wo, C = o_ref.shape
    S = stride

    @pl.when(r == 0)
    def _():
        pool_ref[...] = jnp.zeros_like(pool_ref)

    w = w_ref[...].astype(jnp.float32)
    acc = jnp.zeros((TR, Wo, C), jnp.float32)
    row0 = r * TR
    for di in range(k):
        for dj in range(k):
            t = di * k + dj
            pi = (di % S) * S + (dj % S)
            ro, co = di // S, dj // S
            tap = p_ref[pi, 0, pl.ds(ro + row0, TR), pl.ds(co, Wo), :]
            acc = acc + tap.astype(jnp.float32) * w[t].reshape(1, 1, C)
    y = acc + b_ref[0].reshape(1, 1, C)
    y = y * jax.nn.sigmoid(y)  # SiLU (BN already folded into w/bias)
    o_ref[0] = y.astype(o_ref.dtype)
    # Fused SE squeeze: running spatial mean of the activated output (accumulator output).
    pool_ref[...] += jnp.sum(y, axis=(0, 1)).reshape(1, 1, C) * inv_hw


def _phase_decompose(x, k, stride):
    """(N,H,W,C) -> (S*S, N, Hq, Wq, C) zero-padded, stride-phase-split input.

    Replaces the HBM-materialized k*k im2col (9x/25x traffic) with a 1x rearrangement;
    every in-kernel tap becomes a unit-stride static-offset slice."""
    pad = k // 2
    S = stride
    x = jnp.pad(x, ((0, 0), (pad, pad), (pad, pad), (0, 0)))
    N, Hp, Wp, C = x.shape
    Hq, Wq = -(-Hp // S), -(-Wp // S)
    if Hq * S != Hp or Wq * S != Wp:
        x = jnp.pad(x, ((0, 0), (0, Hq * S - Hp), (0, Wq * S - Wp), (0, 0)))
    phases = [x[:, p::S, q::S, :] for p in range(S) for q in range(S)]
    return jnp.stack(phases, axis=0)


def _pick_row_tile(ho, wo, c, budget):
    per_row = wo * c * (4 + 4 + 2)  # f32 acc + f32 temps + bf16 out, rough
    tr = 1
    for d in range(1, ho + 1):
        if ho % d == 0 and d * per_row <= budget:
            tr = d
    return tr


def dwconv_se(x, w, bias, k, stride):
    """Fused depthwise conv (+BN) + SiLU + SE squeeze.

    x:(N,H,W,C) bf16, w:(k*k,C), bias:(C,) -> (y:(N,Ho,Wo,C) bf16, pooled:(N,C) f32)."""
    cfg = _gen_config()
    N, H, W, C = x.shape
    pad = k // 2
    Ho = (H + 2 * pad - k) // stride + 1
    Wo = (W + 2 * pad - k) // stride + 1
    phases = _phase_decompose(x.astype(jnp.bfloat16), k, stride)
    SS, _, Hq, Wq, _ = phases.shape
    tr = _pick_row_tile(Ho, Wo, C, cfg["dw_budget"])
    kernel = functools.partial(
        _dwconv_se_kernel, k=k, stride=stride, inv_hw=1.0 / float(Ho * Wo)
    )
    y, pooled = pl.pallas_call(
        kernel,
        out_shape=(
            jax.ShapeDtypeStruct((N, Ho, Wo, C), jnp.bfloat16),
            jax.ShapeDtypeStruct((N, 1, C), jnp.float32),
        ),
        grid_spec=pltpu.PrefetchScalarGridSpec(
            num_scalar_prefetch=0,
            grid=(N, Ho // tr),
            in_specs=[
                # Constant block index across the row axis -> fetched once per image.
                pl.BlockSpec((SS, 1, Hq, Wq, C), lambda n, r: (0, n, 0, 0, 0)),
                pl.BlockSpec((k * k, C), lambda n, r: (0, 0)),
                pl.BlockSpec((1, C), lambda n, r: (0, 0)),
            ],
            out_specs=(
                pl.BlockSpec((1, tr, Wo, C), lambda n, r: (n, r, 0, 0)),
                pl.BlockSpec((1, 1, C), lambda n, r: (n, 0, 0)),
            ),
        ),
        compiler_params=pltpu.CompilerParams(
            # pooled output revisits its block across the row axis -> "arbitrary".
            dimension_semantics=("parallel", "arbitrary"),
            vmem_limit_bytes=cfg["vmem"],
        ),
    )(phases, w.astype(jnp.float32), bias.reshape(1, C).astype(jnp.float32))
    return y, pooled.reshape(N, C)


def _mean_pool_kernel(x_ref, o_ref):
    o_ref[...] = jnp.mean(x_ref[...].astype(jnp.float32), axis=1, keepdims=True)


def mean_pool(x):
    """(N, HW, C) -> (N, C).  Uses the full channel dim as one block whenever it fits
    (head pooling = 1 grid step per image instead of 10 tiny 128-lane steps)."""
    cfg = _gen_config()
    N, HW, C = x.shape
    cb = C
    if HW * C * x.dtype.itemsize > 4 * MB:
        cb = 128 if C % 128 == 0 else C
    out = pl.pallas_call(
        _mean_pool_kernel,
        out_shape=jax.ShapeDtypeStruct((N, 1, C), jnp.float32),
        grid_spec=pltpu.PrefetchScalarGridSpec(
            num_scalar_prefetch=0,
            grid=(N, C // cb),
            in_specs=[pl.BlockSpec((1, HW, cb), lambda n, j: (n, 0, j))],
            out_specs=pl.BlockSpec((1, 1, cb), lambda n, j: (n, 0, j)),
        ),
        compiler_params=pltpu.CompilerParams(
            dimension_semantics=("parallel", "parallel"),
            vmem_limit_bytes=cfg["vmem"],
        ),
    )(x)
    return out.reshape(N, C)


def _se_kernel(p_ref, w1_ref, b1_ref, w2_ref, b2_ref, o_ref):
    # fused squeeze-excite FC stack: pooled -> silu(fc1) -> sigmoid(fc2)
    h = jnp.dot(p_ref[...].astype(jnp.bfloat16), w1_ref[...],
                preferred_element_type=jnp.float32) + b1_ref[...]
    h = h * jax.nn.sigmoid(h)
    s = jnp.dot(h.astype(jnp.bfloat16), w2_ref[...],
                preferred_element_type=jnp.float32) + b2_ref[...]
    o_ref[...] = jax.nn.sigmoid(s)


def se_gate(pooled, p):
    """pooled:(N,Cp) f32 -> per-channel SE gate (N,Cp) f32 (both FCs in one kernel)."""
    N, C = pooled.shape
    w1, b1, w2, b2 = p["w1"], p["b1"], p["w2"], p["b2"]
    if w1.shape[0] < C:  # padded expanded channels: zero rows/cols are inert
        w1 = jnp.pad(w1, ((0, C - w1.shape[0]), (0, 0)))
        w2 = jnp.pad(w2, ((0, 0), (0, C - w2.shape[1])))
        b2 = jnp.pad(b2, (0, C - b2.shape[0]))
    return pl.pallas_call(
        _se_kernel, out_shape=jax.ShapeDtypeStruct((N, C), jnp.float32)
    )(
        pooled.astype(jnp.float32),
        w1.astype(jnp.bfloat16), b1.reshape(1, -1).astype(jnp.float32),
        w2.astype(jnp.bfloat16), b2.reshape(1, -1).astype(jnp.float32),
    )


def _project_kernel(a_ref, s_ref, w_ref, b_ref, *rest, has_skip):
    # Fused: SE channel-scale -> 1x1 project matmul -> BN bias -> (optional) residual add.
    if has_skip:
        skip_ref, o_ref = rest
    else:
        (o_ref,) = rest
    a = a_ref[0].astype(jnp.float32) * s_ref[0]               # (thw, Cexp) * (1, Cexp)
    y = jnp.dot(a.astype(jnp.bfloat16), w_ref[...], preferred_element_type=jnp.float32)
    y = y + b_ref[...]
    if has_skip:
        y = y + skip_ref[0].astype(jnp.float32)
    o_ref[0] = y.astype(o_ref.dtype)


def project_conv(x, s, w, bias, skip=None):
    """Fused SE-scale + project conv (+ residual).  x:(N,HW,Cexp_p) s:(N,Cexp_p) w:(Cexp,Cout).

    Cout>=64 is padded to a 128-multiple (lane-dense stores); the zero channels stay in
    the trunk so no slice-back HBM pass is added."""
    cfg = _gen_config()
    N, HW, K = x.shape
    kin, cout = w.shape
    if K > kin:  # expanded-channel zero padding (inert)
        w = jnp.pad(w, ((0, K - kin), (0, 0)))
    coutp = _pad_cout(cout)
    if coutp != cout:
        w = jnp.pad(w, ((0, 0), (0, coutp - cout)))
        bias = jnp.pad(bias, (0, coutp - cout))
    hwp = _round_up(HW, 16)
    thw = min(cfg["thw"], hwp)
    hwp = _round_up(hwp, thw)
    x_p = x.astype(jnp.bfloat16)
    if hwp != HW:
        x_p = jnp.pad(x_p, ((0, 0), (0, hwp - HW), (0, 0)))
    args = [
        x_p,
        s.reshape(N, 1, K).astype(jnp.float32),
        w.astype(jnp.bfloat16),
        bias.reshape(1, coutp).astype(jnp.float32),
    ]
    in_specs = [
        pl.BlockSpec((1, thw, K), lambda n, i: (n, i, 0)),
        pl.BlockSpec((1, 1, K), lambda n, i: (n, 0, 0)),
        pl.BlockSpec((K, coutp), lambda n, i: (0, 0)),
        pl.BlockSpec((1, coutp), lambda n, i: (0, 0)),
    ]
    has_skip = skip is not None
    if has_skip:
        assert skip.shape[-1] == coutp, (skip.shape, coutp)
        skip_p = skip.astype(jnp.bfloat16)
        if hwp != HW:
            skip_p = jnp.pad(skip_p, ((0, 0), (0, hwp - HW), (0, 0)))
        args.append(skip_p)
        in_specs.append(pl.BlockSpec((1, thw, coutp), lambda n, i: (n, i, 0)))
    out = pl.pallas_call(
        functools.partial(_project_kernel, has_skip=has_skip),
        out_shape=jax.ShapeDtypeStruct((N, hwp, coutp), jnp.bfloat16),
        grid_spec=pltpu.PrefetchScalarGridSpec(
            num_scalar_prefetch=0,
            grid=(N, hwp // thw),
            in_specs=in_specs,
            out_specs=pl.BlockSpec((1, thw, coutp), lambda n, i: (n, i, 0)),
        ),
        compiler_params=pltpu.CompilerParams(
            dimension_semantics=("parallel", "parallel"),
            vmem_limit_bytes=cfg["vmem"],
        ),
    )(*args)
    return out[:, :HW, :] if hwp != HW else out


def _lstm_kernel(xg_ref, whh_ref, o_ref, *, T, H, unroll):
    N = o_ref.shape[0]

    def step(t, carry):
        h, c = carry
        gates = xg_ref[t] + jnp.dot(
            h.astype(jnp.bfloat16), whh_ref[...], preferred_element_type=jnp.float32
        )
        # Full-width (N, 4H) EUP passes, then static lane slices; PyTorch order i|f|g|o.
        sg = jax.nn.sigmoid(gates)
        tg = jnp.tanh(gates)
        i = sg[:, 0 * H:1 * H]
        f = sg[:, 1 * H:2 * H]
        g = tg[:, 2 * H:3 * H]
        o = sg[:, 3 * H:4 * H]
        c = f * c + i * g
        h = o * jnp.tanh(c)
        return h, c

    h0 = jnp.zeros((N, H), jnp.float32)
    c0 = jnp.zeros((N, H), jnp.float32)
    h, _ = jax.lax.fori_loop(0, T, step, (h0, c0), unroll=unroll)
    o_ref[...] = h


def lstm_last_hidden(xg, whh):
    """Run the whole LSTM recurrence in one kernel invocation; return the final hidden state.

    xg:(T,N,4H) precomputed x_t @ W_ih^T + b_ih + b_hh (f32); whh:(H,4H)."""
    T, N, G = xg.shape
    H = G // 4
    unroll = True if T <= 16 else 8  # bound code size for long sequences (review)
    return pl.pallas_call(
        functools.partial(_lstm_kernel, T=T, H=H, unroll=unroll),
        out_shape=jax.ShapeDtypeStruct((N, H), jnp.float32),
    )(xg.astype(jnp.float32), whh.astype(jnp.bfloat16))


def _tail_kernel(pool_ref, qh_ref, w1_ref, b1_ref, w2_ref, b2_ref,
                 wf1i_ref, wf1q_ref, bf1_ref, wf2_ref, bf2_ref, o_ref):
    # Fused classifier + combine head:
    #   h   = relu(pooled @ W1 + b1)
    #   img = h @ W2 + b2
    #   out = tanh(cat(img, q) @ Wf1 + bf1) @ Wf2 + bf2   (concat folded into a split dot)
    bf16 = jnp.bfloat16
    h = jnp.dot(pool_ref[...].astype(bf16), w1_ref[...],
                preferred_element_type=jnp.float32) + b1_ref[...]
    h = jnp.maximum(h, 0.0)
    img = jnp.dot(h.astype(bf16), w2_ref[...],
                  preferred_element_type=jnp.float32) + b2_ref[...]
    comb = (
        jnp.dot(img.astype(bf16), wf1i_ref[...], preferred_element_type=jnp.float32)
        + jnp.dot(qh_ref[...].astype(bf16), wf1q_ref[...], preferred_element_type=jnp.float32)
        + bf1_ref[...]
    )
    comb = jnp.tanh(comb)
    out = jnp.dot(comb.astype(bf16), wf2_ref[...],
                  preferred_element_type=jnp.float32) + bf2_ref[...]
    o_ref[...] = out


def fused_tail(pooled, q_hidden, params):
    N = pooled.shape[0]
    num_classes = params["fc2_w"].shape[1]
    bf16 = jnp.bfloat16
    return pl.pallas_call(
        _tail_kernel,
        out_shape=jax.ShapeDtypeStruct((N, num_classes), jnp.float32),
    )(
        pooled.astype(jnp.float32), q_hidden.astype(jnp.float32),
        params["cls_w1"].astype(bf16), params["cls_b1"].reshape(1, -1).astype(jnp.float32),
        params["cls_w2"].astype(bf16), params["cls_b2"].reshape(1, -1).astype(jnp.float32),
        params["fc1_w"][:32].astype(bf16), params["fc1_w"][32:].astype(bf16),
        params["fc1_b"].reshape(1, -1).astype(jnp.float32),
        params["fc2_w"].astype(bf16), params["fc2_b"].reshape(1, -1).astype(jnp.float32),
    )


# ----------------------------------------------------------------------------
# Plain-JAX glue (im2col for the stem, BN folding, network structure)
# ----------------------------------------------------------------------------
def im2col(x, k, stride, pad):
    """x:(N,H,W,C) -> patches:(N,Ho,Wo,k*k,C).  Only used for the 3-channel stem conv."""
    if pad:
        x = jnp.pad(x, ((0, 0), (pad, pad), (pad, pad), (0, 0)))
    N, Hp, Wp, C = x.shape
    Ho = (Hp - k) // stride + 1
    Wo = (Wp - k) // stride + 1
    taps = []
    for i in range(k):
        for j in range(k):
            taps.append(x[:, i:i + stride * Ho:stride, j:j + stride * Wo:stride, :])
    return jnp.stack(taps, axis=3)


def _bn_fold(p):
    scale = p["gamma"] * jax.lax.rsqrt(p["var"] + BN_EPS)
    bias = p["beta"] - p["mean"] * scale
    return scale, bias


def conv_bn_act(x, p, stride, act, cout_pad=None):
    """Conv2d(bias=False) + BatchNorm (folded) + activation, via the Pallas matmul kernel."""
    scale, bias = _bn_fold(p)
    w = p["w"] * scale  # fold BN scale into conv weights (HWIO, scale over O)
    kh, kw, cin, cout = w.shape
    N = x.shape[0]
    cin_x = x.shape[-1]
    if kh == 1 and stride == 1:
        H, W = x.shape[1], x.shape[2]
        a = x.reshape(N * H * W, cin_x)
        w2 = w.reshape(cin, cout)
        if cin_x > cin:  # padded trunk channels: zero weight rows are inert
            w2 = jnp.pad(w2, ((0, cin_x - cin), (0, 0)))
        Ho, Wo = H, W
    else:
        patches = im2col(x, kh, stride, kh // 2)
        _, Ho, Wo, KK, _ = patches.shape
        a = patches.reshape(N * Ho * Wo, KK * cin_x)
        w2 = w.reshape(kh * kw * cin, cout)
    if cout_pad is not None and cout_pad > cout:
        w2 = jnp.pad(w2, ((0, 0), (0, cout_pad - cout)))
        bias = jnp.pad(bias, (0, cout_pad - cout))
        cout = cout_pad
    y = matmul_bias_act(a, w2, bias, act=act)
    return y.reshape(N, Ho, Wo, cout)


def dwconv_bn_act(x, p, k, stride):
    """Depthwise Conv2d(groups=C) + BN (folded) + SiLU, with the SE squeeze fused."""
    scale, bias = _bn_fold(p)
    w = p["w"] * scale[None, :]  # (KK, C)
    C = x.shape[-1]
    if w.shape[1] < C:  # padded expanded channels
        w = jnp.pad(w, ((0, 0), (0, C - w.shape[1])))
        bias = jnp.pad(bias, (0, C - bias.shape[0]))
    return dwconv_se(x, w, bias, k, stride)


def mbconv(x, p, k, stride, expand, cin, cout):
    inp = x
    h = x
    if expand != 1:
        cexp = cin * expand
        h = conv_bn_act(h, p["expand"], 1, "silu", cout_pad=_pad_cexp(cexp))
    # depthwise conv + BN + SiLU with the SE squeeze (spatial mean) fused into the kernel
    h, pooled = dwconv_bn_act(h, p["dw"], k, stride)
    N, Ho, Wo, Cp = h.shape
    hf = h.reshape(N, Ho * Wo, Cp)
    gate = se_gate(pooled, p["se"])  # (N, Cp) f32 sigmoid gate

    scale, bias = _bn_fold(p["project"])
    wproj = p["project"]["w"].reshape(-1, cout) * scale
    skip = None
    if stride == 1 and cin == cout:
        # StochasticDepth is identity at inference time; residual fused into the epilogue.
        skip = inp.reshape(N, Ho * Wo, inp.shape[-1])
    out = project_conv(hf, gate, wproj, bias, skip)
    return out.reshape(N, Ho, Wo, out.shape[-1])


def efficientnet_features(x, params):
    h = conv_bn_act(x, params["stem"], 2, "silu")
    for si, (expand, k, stride, cin, cout, reps) in enumerate(MBCONV_CFG):
        for bi in range(reps):
            s = stride if bi == 0 else 1
            ci = cin if bi == 0 else cout
            h = mbconv(h, params["blocks"][si][bi], k, s, expand, ci, cout)
    h = conv_bn_act(h, params["head"], 1, "silu")
    return h


def efficientnet_lstm_forward(params, img_nchw, question):
    # PyTorch NCHW image -> NHWC once; all conv math runs in NHWC with bf16 activations.
    x = jnp.transpose(img_nchw, (0, 2, 3, 1)).astype(jnp.bfloat16)
    feat = efficientnet_features(x, params)                     # (N, Hf, Wf, 1280) bf16
    N, Hf, Wf, C = feat.shape
    pooled = mean_pool(feat.reshape(N, Hf * Wf, C))             # AdaptiveAvgPool2d(1)+Flatten
    # Dropout(0.2) is identity in eval mode.

    emb = jnp.take(params["embedding"], question, axis=0)       # (N, T, word_embed)
    Nq, T, E = emb.shape
    # nn.LSTM(bidirectional=True): hidden[-1] is the reverse direction's final hidden
    # state, i.e. a forward recurrence over the time-reversed sequence.
    xg = matmul_bias_act(
        emb.reshape(Nq * T, E), params["lstm_wih"], params["lstm_b"],
        act="none", out_dtype=jnp.float32,
    )
    xg = xg.reshape(Nq, T, -1)[:, ::-1, :]                      # reverse time
    xg = jnp.transpose(xg, (1, 0, 2))                           # (T, N, 4H)
    q_hidden = lstm_last_hidden(xg, params["lstm_whh"])         # (N, 32)

    # classifier + concat + combine FCs fused into one kernel
    return fused_tail(pooled, q_hidden, params)


# ----------------------------------------------------------------------------
# Deterministic synthetic parameter init (shapes from the PyTorch __init__)
# ----------------------------------------------------------------------------
def init_params(key, vocab_size, num_classes, word_embed=300, lstm_hidden=32):
    counter = [0]

    def rnd(shape, scale=0.05):
        counter[0] += 1
        return jax.random.normal(
            jax.random.fold_in(key, counter[0]), shape, jnp.float32
        ) * scale

    def conv_bn(kh, cin, cout):
        return {
            "w": rnd((kh, kh, cin, cout)),
            "gamma": 1.0 + rnd((cout,), 0.01),
            "beta": rnd((cout,), 0.01),
            "mean": jnp.zeros((cout,), jnp.float32),
            "var": jnp.ones((cout,), jnp.float32),
        }

    def dw_bn(k, c):
        return {
            "w": rnd((k * k, c)),
            "gamma": 1.0 + rnd((c,), 0.01),
            "beta": rnd((c,), 0.01),
            "mean": jnp.zeros((c,), jnp.float32),
            "var": jnp.ones((c,), jnp.float32),
        }

    params = {"stem": conv_bn(3, 3, 32), "blocks": []}
    for expand, k, stride, cin, cout, reps in MBCONV_CFG:
        stage = []
        for bi in range(reps):
            ci = cin if bi == 0 else cout
            cexp = ci * expand
            csq = max(1, ci // 4)
            bp = {}
            if expand != 1:
                bp["expand"] = conv_bn(1, ci, cexp)
            bp["dw"] = dw_bn(k, cexp)
            bp["se"] = {
                "w1": rnd((cexp, csq)), "b1": rnd((csq,)),
                "w2": rnd((csq, cexp)), "b2": rnd((cexp,)),
            }
            bp["project"] = conv_bn(1, cexp, cout)
            stage.append(bp)
        params["blocks"].append(stage)
    params["head"] = conv_bn(1, 320, 1280)

    # classifier: Linear(1280,512) -> ReLU -> Linear(512,32)
    params["cls_w1"] = rnd((1280, 512))
    params["cls_b1"] = rnd((512,))
    params["cls_w2"] = rnd((512, 32))
    params["cls_b2"] = rnd((32,))

    params["embedding"] = rnd((vocab_size, word_embed), 0.1)
    # reverse-direction LSTM weights (PyTorch gate order i|f|g|o), stored transposed;
    # lstm_b = b_ih + b_hh combined.
    params["lstm_wih"] = rnd((word_embed, 4 * lstm_hidden))
    params["lstm_whh"] = rnd((lstm_hidden, 4 * lstm_hidden))
    params["lstm_b"] = rnd((4 * lstm_hidden,))

    # combine head: cat(img[0:32], question[32:64]) -> fc1(64,64) -> tanh -> fc2(64,classes)
    params["fc1_w"] = rnd((64, 64))
    params["fc1_b"] = rnd((64,))
    params["fc2_w"] = rnd((64, num_classes))
    params["fc2_b"] = rnd((num_classes,))
    return params


if __name__ == "__main__":
    key = jax.random.PRNGKey(0)
    vocab_size, num_classes = 50, 10
    params = init_params(jax.random.fold_in(key, 1), vocab_size, num_classes)

    # Small shapes: batch=2, RGB image 32x32 (NCHW like PyTorch), question seq len 8.
    img = jax.random.normal(jax.random.fold_in(key, 2), (2, 3, 32, 32), jnp.float32)
    question = jax.random.randint(
        jax.random.fold_in(key, 3), (2, 8), 0, vocab_size, jnp.int32
    )

    out = efficientnet_lstm_forward(params, img, question)
    out = jax.block_until_ready(out)
    assert out.shape == (2, num_classes), out.shape
    assert jnp.all(jnp.isfinite(out))
    print("KERNEL_OK")
</pallas_src>

<mosaic_0001>
module attributes {stable_mosaic.version = 11 : i64} {
  func.func @_matmul_kernel(%arg0: i32, %arg1: i32, %arg2: memref<512x32xbf16, #tpu.memory_space<vmem>>, %arg3: memref<32x32xbf16, #tpu.memory_space<vmem>>, %arg4: memref<1x32xf32, #tpu.memory_space<vmem>>, %arg5: memref<512x32xbf16, #tpu.memory_space<vmem>>) attributes {dimension_semantics = [#tpu.dimension_semantics<parallel>, #tpu.dimension_semantics<parallel>], iteration_bounds = array<i64: 1, 1>, scalar_prefetch = 0 : i64, scratch_operands = 0 : i64, tpu.core_type = #tpu.core_type<tc>, window_params = [{transform_indices = @transform_0, window_bounds = array<i64: 512, 32>}, {transform_indices = @transform_1, window_bounds = array<i64: 32, 32>}, {transform_indices = @transform_2, window_bounds = array<i64: 1, 32>}, {transform_indices = @transform_3, window_bounds = array<i64: 512, 32>}]} {
    %c0 = arith.constant 0 : index
    %c0_0 = arith.constant 0 : index
    %0 = vector.load %arg2[%c0, %c0_0] : memref<512x32xbf16, #tpu.memory_space<vmem>>, vector<512x32xbf16>
    %c0_1 = arith.constant 0 : index
    %c0_2 = arith.constant 0 : index
    %1 = vector.load %arg3[%c0_1, %c0_2] : memref<32x32xbf16, #tpu.memory_space<vmem>>, vector<32x32xbf16>
    %cst = arith.constant dense<0.000000e+00> : vector<512x32xf32>
    %2 = tpu.matmul %0, %1, %cst {dimension_numbers = #tpu.dot_dimension_numbers<[1], [0], [0], [1], [0, 0, 1, 1], [], []>} : vector<512x32xbf16>, vector<32x32xbf16>, vector<512x32xf32> -> vector<512x32xf32>
    %c0_3 = arith.constant 0 : index
    %c0_4 = arith.constant 0 : index
    %3 = vector.load %arg4[%c0_3, %c0_4] : memref<1x32xf32, #tpu.memory_space<vmem>>, vector<1x32xf32>
    %4 = vector.broadcast %3 : vector<1x32xf32> to vector<512x32xf32>
    %5 = arith.addf %2, %4 : vector<512x32xf32>
    %6 = arith.negf %5 : vector<512x32xf32>
    %7 = math.exp %6 : vector<512x32xf32>
    %cst_5 = arith.constant 1.000000e+00 : f32
    %8 = vector.broadcast %cst_5 : f32 to vector<512x32xf32>
    %9 = arith.addf %8, %7 : vector<512x32xf32>
    %10 = arith.divf %8, %9 : vector<512x32xf32>
    %11 = arith.mulf %5, %10 : vector<512x32xf32>
    %12 = arith.truncf %11 : vector<512x32xf32> to vector<512x32xbf16>
    %c0_6 = arith.constant 0 : index
    %c0_7 = arith.constant 0 : index
    %13 = vector.load %arg5[%c0_6, %c0_7] : memref<512x32xbf16, #tpu.memory_space<vmem>>, vector<512x32xbf16>
    tpu.vector_store %arg5[%c0_6, %c0_7], %12 {strides = array<i32>} : memref<512x32xbf16, #tpu.memory_space<vmem>>, vector<512x32xbf16>,
    return
  }
  func.func @transform_0(%arg0: i32, %arg1: i32) -> (i32, i32) {
    %c0_i32 = arith.constant 0 : i32
    %c0_i32_0 = arith.constant 0 : i32
    return %arg0, %c0_i32 : i32, i32
  }
  func.func @transform_1(%arg0: i32, %arg1: i32) -> (i32, i32) {
    %c0_i32 = arith.constant 0 : i32
    %c0_i32_0 = arith.constant 0 : i32
    return %c0_i32, %arg1 : i32, i32
  }
  func.func @transform_2(%arg0: i32, %arg1: i32) -> (i32, i32) {
    %c0_i32 = arith.constant 0 : i32
    %c0_i32_0 = arith.constant 0 : i32
    return %c0_i32, %arg1 : i32, i32
  }
  func.func @transform_3(%arg0: i32, %arg1: i32) -> (i32, i32) {
    %c0_i32 = arith.constant 0 : i32
    return %arg0, %arg1 : i32, i32
  }
}

</mosaic_0001>

<llo_original>
// kernel: tpu_custom_call.1
$region0: #{tpu_custom_call.1}
  #allocation0 [shape = 'u32[]', space=smem, size = 0x4, offset = 0x4, fixed_abs, tag = 'smem constant byte address 0x4 - core index']
  #allocation1 [shape = 'u32[144,128]{1,0:T(1,128)}', space=vmem, size = 0x12000, scoped, tag = 'internal scratch']
  %s0 = inlined_call_operand.vmem [shape: bf16[512,32], index: 0, kind: input, shape index: {}]
  %s1 = inlined_call_operand.vmem [shape: bf16[32,32], index: 1, kind: input, shape index: {}]
  %s2 = inlined_call_operand.vmem [shape: f32[1,32], index: 2, kind: input, shape index: {}]
  %s3 = inlined_call_operand.vmem [shape: bf16[512,32], index: 3, kind: output, shape index: {}]
  %s4 = sld [smem:[#allocation0]]
  $region22: #{tpu_custom_call.1} parent=0
    _
  %s6 = ssub.s32 1, %s4
  %s7 = scalar_select 0, %s6, %s4
  // Predicated region
  $region2: #{tpu_custom_call.1} parent=0 // pred_check
    _
  $region3: #{tpu_custom_call.1} parent=0 // pred_check_branch
    %9 = sbr.rel (0) target = $region5
  $region4: #{tpu_custom_call.1} parent=0 // pred_region
    _
  $region5: #{tpu_custom_call.1} parent=0 // pred_fallthru
    _
  // Predicated region
  $region6: #{tpu_custom_call.1} parent=0 // pred_check
    _
  $region7: #{tpu_custom_call.1} parent=0 // pred_check_branch
    %11 = sbr.rel (0) target = $region9
  $region8: #{tpu_custom_call.1} parent=0 // pred_region
    _
  $region9: #{tpu_custom_call.1} parent=0 // pred_fallthru
    _
  // Predicated region
  $region10: #{tpu_custom_call.1} parent=0 // pred_check
    _
  $region11: #{tpu_custom_call.1} parent=0 // pred_check_branch
    %13 = sbr.rel (0) target = $region13
  $region12: #{tpu_custom_call.1} parent=0 // pred_region
    _
  $region13: #{tpu_custom_call.1} parent=0 // pred_fallthru
    _
  %v15 = vld [vmem:[%s0] sm:$0xf]
  %v16 = vld [vmem:[%s0 + $0x4] sm:$0xf]
  %v17 = vld [vmem:[%s0 + $0x8] sm:$0xf]
  %v18 = vld [vmem:[%s0 + $0xc] sm:$0xf]
  %v19 = vld [vmem:[%s0 + $0x10] sm:$0xf]
  %v20 = vld [vmem:[%s0 + $0x14] sm:$0xf]
  %v21 = vld [vmem:[%s0 + $0x18] sm:$0xf]
  %v22 = vld [vmem:[%s0 + $0x1c] sm:$0xf]
  %v23 = vld [vmem:[%s0 + $0x20] sm:$0xf]
  %v24 = vld [vmem:[%s0 + $0x24] sm:$0xf]
  %v25 = vld [vmem:[%s0 + $0x28] sm:$0xf]
  %v26 = vld [vmem:[%s0 + $0x2c] sm:$0xf]
  %v27 = vld [vmem:[%s0 + $0x30] sm:$0xf]
  %v28 = vld [vmem:[%s0 + $0x34] sm:$0xf]
  %v29 = vld [vmem:[%s0 + $0x38] sm:$0xf]
  %v30 = vld [vmem:[%s0 + $0x3c] sm:$0xf]
  %v31 = vld [vmem:[%s0 + $0x40] sm:$0xf]
  %v32 = vld [vmem:[%s0 + $0x44] sm:$0xf]
  %v33 = vld [vmem:[%s0 + $0x48] sm:$0xf]
  %v34 = vld [vmem:[%s0 + $0x4c] sm:$0xf]
  %v35 = vld [vmem:[%s0 + $0x50] sm:$0xf]
  %v36 = vld [vmem:[%s0 + $0x54] sm:$0xf]
  %v37 = vld [vmem:[%s0 + $0x58] sm:$0xf]
  %v38 = vld [vmem:[%s0 + $0x5c] sm:$0xf]
  %v39 = vld [vmem:[%s0 + $0x60] sm:$0xf]
  %v40 = vld [vmem:[%s0 + $0x64] sm:$0xf]
  %v41 = vld [vmem:[%s0 + $0x68] sm:$0xf]
  %v42 = vld [vmem:[%s0 + $0x6c] sm:$0xf]
  %v43 = vld [vmem:[%s0 + $0x70] sm:$0xf]
  %v44 = vld [vmem:[%s0 + $0x74] sm:$0xf]
  %v45 = vld [vmem:[%s0 + $0x78] sm:$0xf]
  %v46 = vld [vmem:[%s0 + $0x7c] sm:$0xf]
  %v47 = vld [vmem:[%s0 + $0x80] sm:$0xf]
  %v48 = vld [vmem:[%s0 + $0x84] sm:$0xf]
  %v49 = vld [vmem:[%s0 + $0x88] sm:$0xf]
  %v50 = vld [vmem:[%s0 + $0x8c] sm:$0xf]
  %v51 = vld [vmem:[%s0 + $0x90] sm:$0xf]
  %v52 = vld [vmem:[%s0 + $0x94] sm:$0xf]
  %v53 = vld [vmem:[%s0 + $0x98] sm:$0xf]
  %v54 = vld [vmem:[%s0 + $0x9c] sm:$0xf]
  %v55 = vld [vmem:[%s0 + $0xa0] sm:$0xf]
  %v56 = vld [vmem:[%s0 + $0xa4] sm:$0xf]
  %v57 = vld [vmem:[%s0 + $0xa8] sm:$0xf]
  %v58 = vld [vmem:[%s0 + $0xac] sm:$0xf]
  %v59 = vld [vmem:[%s0 + $0xb0] sm:$0xf]
  %v60 = vld [vmem:[%s0 + $0xb4] sm:$0xf]
  %v61 = vld [vmem:[%s0 + $0xb8] sm:$0xf]
  %v62 = vld [vmem:[%s0 + $0xbc] sm:$0xf]
  %v63 = vld [vmem:[%s0 + $0xc0] sm:$0xf]
  %v64 = vld [vmem:[%s0 + $0xc4] sm:$0xf]
  %v65 = vld [vmem:[%s0 + $0xc8] sm:$0xf]
  %v66 = vld [vmem:[%s0 + $0xcc] sm:$0xf]
  %v67 = vld [vmem:[%s0 + $0xd0] sm:$0xf]
  %v68 = vld [vmem:[%s0 + $0xd4] sm:$0xf]
  %v69 = vld [vmem:[%s0 + $0xd8] sm:$0xf]
  %v70 = vld [vmem:[%s0 + $0xdc] sm:$0xf]
  %v71 = vld [vmem:[%s0 + $0xe0] sm:$0xf]
  %v72 = vld [vmem:[%s0 + $0xe4] sm:$0xf]
  %v73 = vld [vmem:[%s0 + $0xe8] sm:$0xf]
  %v74 = vld [vmem:[%s0 + $0xec] sm:$0xf]
  %v75 = vld [vmem:[%s0 + $0xf0] sm:$0xf]
  %v76 = vld [vmem:[%s0 + $0xf4] sm:$0xf]
  %v77 = vld [vmem:[%s0 + $0xf8] sm:$0xf]
  %v78 = vld [vmem:[%s0 + $0xfc] sm:$0xf]
  %v79 = vld [vmem:[%s1] sm:$0xf]
  %v80 = vld [vmem:[%s1 + $0x4] sm:$0xf]
  %v81 = vld [vmem:[%s1 + $0x8] sm:$0xf]
  %v82 = vld [vmem:[%s1 + $0xc] sm:$0xf]
  %v83 = vld [vmem:[%s2] sm:$0x1]
  %v85 = vlaneseq
  %v86 = vshrl.u32 %v85, 7
  %v87 = vsub.s32 0, %v86
  %v88 = vrot.slane %v83, %v87
  %v154 = vunpack.c.l.b16 %v15
  %v155 = vunpack.c.l.b16 %v16
  %v156 = vunpack.c.l.b16 %v17
  %v157 = vunpack.c.l.b16 %v18
  %v158 = vunpack.c.l.b16 %v19
  %v159 = vunpack.c.l.b16 %v20
  %v160 = vunpack.c.l.b16 %v21
  %v161 = vunpack.c.l.b16 %v22
  %v162 = vunpack.c.l.b16 %v23
  %v163 = vunpack.c.l.b16 %v24
  %v164 = vunpack.c.l.b16 %v25
  %v165 = vunpack.c.l.b16 %v26
  %v166 = vunpack.c.l.b16 %v27
  %v167 = vunpack.c.l.b16 %v28
  %v168 = vunpack.c.l.b16 %v29
  %v169 = vunpack.c.l.b16 %v30
  %v170 = vunpack.c.l.b16 %v31
  %v171 = vunpack.c.l.b16 %v32
  %v172 = vunpack.c.l.b16 %v33
  %v173 = vunpack.c.l.b16 %v34
  %v174 = vunpack.c.l.b16 %v35
  %v175 = vunpack.c.l.b16 %v36
  %v176 = vunpack.c.l.b16 %v37
  %v177 = vunpack.c.l.b16 %v38
  %v178 = vunpack.c.l.b16 %v39
  %v179 = vunpack.c.l.b16 %v40
  %v180 = vunpack.c.l.b16 %v41
  %v181 = vunpack.c.l.b16 %v42
  %v182 = vunpack.c.l.b16 %v43
  %v183 = vunpack.c.l.b16 %v44
  %v184 = vunpack.c.l.b16 %v45
  %v185 = vunpack.c.l.b16 %v46
  %v186 = vunpack.c.l.b16 %v47
  %v187 = vunpack.c.l.b16 %v48
  %v188 = vunpack.c.l.b16 %v49
  %v189 = vunpack.c.l.b16 %v50
  %v190 = vunpack.c.l.b16 %v51
  %v191 = vunpack.c.l.b16 %v52
  %v192 = vunpack.c.l.b16 %v53
  %v193 = vunpack.c.l.b16 %v54
  %v194 = vunpack.c.l.b16 %v55
  %v195 = vunpack.c.l.b16 %v56
  %v196 = vunpack.c.l.b16 %v57
  %v197 = vunpack.c.l.b16 %v58
  %v198 = vunpack.c.l.b16 %v59
  %v199 = vunpack.c.l.b16 %v60
  %v200 = vunpack.c.l.b16 %v61
  %v201 = vunpack.c.l.b16 %v62
  %v202 = vunpack.c.l.b16 %v63
  %v203 = vunpack.c.l.b16 %v64
  %v204 = vunpack.c.l.b16 %v65
  %v205 = vunpack.c.l.b16 %v66
  %v206 = vunpack.c.l.b16 %v67
  %v207 = vunpack.c.l.b16 %v68
  %v208 = vunpack.c.l.b16 %v69
  %v209 = vunpack.c.l.b16 %v70
  %v210 = vunpack.c.l.b16 %v71
  %v211 = vunpack.c.l.b16 %v72
  %v212 = vunpack.c.l.b16 %v73
  %v213 = vunpack.c.l.b16 %v74
  %v214 = vunpack.c.l.b16 %v75
  %v215 = vunpack.c.l.b16 %v76
  %v216 = vunpack.c.l.b16 %v77
  %v217 = vunpack.c.l.b16 %v78
  %v218 = vpack.c.b16 %v155, %v154
  %v219 = vpack.c.b16 %v157, %v156
  %v220 = vpack.c.b16 %v159, %v158
  %v221 = vpack.c.b16 %v161, %v160
  %v222 = vpack.c.b16 %v163, %v162
  %v223 = vpack.c.b16 %v165, %v164
  %v224 = vpack.c.b16 %v167, %v166
  %v225 = vpack.c.b16 %v169, %v168
  %v226 = vpack.c.b16 %v171, %v170
  %v227 = vpack.c.b16 %v173, %v172
  %v228 = vpack.c.b16 %v175, %v174
  %v229 = vpack.c.b16 %v177, %v176
  %v230 = vpack.c.b16 %v179, %v178
  %v231 = vpack.c.b16 %v181, %v180
  %v232 = vpack.c.b16 %v183, %v182
  %v233 = vpack.c.b16 %v185, %v184
  %v234 = vpack.c.b16 %v187, %v186
  %v235 = vpack.c.b16 %v189, %v188
  %v236 = vpack.c.b16 %v191, %v190
  %v237 = vpack.c.b16 %v193, %v192
  %v238 = vpack.c.b16 %v195, %v194
  %v239 = vpack.c.b16 %v197, %v196
  %v240 = vpack.c.b16 %v199, %v198
  %v241 = vpack.c.b16 %v201, %v200
  %v242 = vpack.c.b16 %v203, %v202
  %v243 = vpack.c.b16 %v205, %v204
  %v244 = vpack.c.b16 %v207, %v206
  %v245 = vpack.c.b16 %v209, %v208
  %v246 = vpack.c.b16 %v211, %v210
  %v247 = vpack.c.b16 %v213, %v212
  %v248 = vpack.c.b16 %v215, %v214
  %v249 = vpack.c.b16 %v217, %v216
  %v254 = vunpack.c.l.b16 %v79
  %v255 = vunpack.c.l.b16 %v80
  %v256 = vunpack.c.l.b16 %v81
  %v257 = vunpack.c.l.b16 %v82
  %v258 = vpack.c.b16 %v255, %v254
  %v259 = vpack.c.b16 %v257, %v256
  %vm262 = vcmask 261120
  %v264 = vsel %vm262, %v218, 0
  %v267 = vsel %vm262, %v219, 0
  %v270 = vsel %vm262, %v220, 0
  %v273 = vsel %vm262, %v221, 0
  %v276 = vsel %vm262, %v222, 0
  %v279 = vsel %vm262, %v223, 0
  %v282 = vsel %vm262, %v224, 0
  %v285 = vsel %vm262, %v225, 0
  %v288 = vsel %vm262, %v226, 0
  %v291 = vsel %vm262, %v227, 0
  %v294 = vsel %vm262, %v228, 0
  %v297 = vsel %vm262, %v229, 0
  %v300 = vsel %vm262, %v230, 0
  %v303 = vsel %vm262, %v231, 0
  %v306 = vsel %vm262, %v232, 0
  %v309 = vsel %vm262, %v233, 0
  %v312 = vsel %vm262, %v234, 0
  %v315 = vsel %vm262, %v235, 0
  %v318 = vsel %vm262, %v236, 0
  %v321 = vsel %vm262, %v237, 0
  %v324 = vsel %vm262, %v238, 0
  %v327 = vsel %vm262, %v239, 0
  %v330 = vsel %vm262, %v240, 0
  %v333 = vsel %vm262, %v241, 0
  %v336 = vsel %vm262, %v242, 0
  %v339 = vsel %vm262, %v243, 0
  %v342 = vsel %vm262, %v244, 0
  %v345 = vsel %vm262, %v245, 0
  %v348 = vsel %vm262, %v246, 0
  %v351 = vsel %vm262, %v247, 0
  %v354 = vsel %vm262, %v248, 0
  %v357 = vsel %vm262, %v249, 0
  %359 = vmatprep.subr.bf16.mxu0 0
  %360 = vmatpush1.bf16.msra.mxu0 %v258
  %361 = vmatprep.subr.bf16.mxu0 0
  %362 = vmatpush1.bf16.msra.mxu0 %v259
  %363 = vmatprep.subr.bf16.mxu0 0
  %364 = vmatpush1.bf16.msra.mxu0 0
  %365 = vmatprep.subr.bf16.mxu0 0
  %366 = vmatpush1.bf16.msra.mxu0 0
  %367 = vmatprep.subr.bf16.mxu0 0
  %368 = vmatpush1.bf16.msra.mxu0 0
  %369 = vmatprep.subr.bf16.mxu0 0
  %370 = vmatpush1.bf16.msra.mxu0 0
  %371 = vmatprep.subr.bf16.mxu0 0
  %372 = vmatpush1.bf16.msra.mxu0 0
  %373 = vmatprep.subr.bf16.mxu0 0
  %374 = vmatpush1.bf16.msra.mxu0 0
  %375 = vmatprep.subr.bf16.mxu0 0
  %376 = vmatpush1.bf16.msra.mxu0 0
  %377 = vmatprep.subr.bf16.mxu0 0
  %378 = vmatpush1.bf16.msra.mxu0 0
  %379 = vmatprep.subr.bf16.mxu0 0
  %380 = vmatpush1.bf16.msra.mxu0 0
  %381 = vmatprep.subr.bf16.mxu0 0
  %382 = vmatpush1.bf16.msra.mxu0 0
  %383 = vmatprep.subr.bf16.mxu0 0
  %384 = vmatpush1.bf16.msra.mxu0 0
  %385 = vmatprep.subr.bf16.mxu0 0
  %386 = vmatpush1.bf16.msra.mxu0 0
  %387 = vmatprep.subr.bf16.mxu0 0
  %388 = vmatpush1.bf16.msra.mxu0 0
  %389 = vmatprep.subr.bf16.mxu0 0
  %390 = vmatpush1.bf16.msra.mxu0 0
  %391 = vmatprep.mubr.bf16.mxu0 0
  %392 = vmatmul.mubr.bf16.gmra.mrb[0].mxu0 %v264
  %v393 = vpop.f32.mrb[0].mxu0
  %v394 = vadd.f32 %v88, %v393
  %v395 = vpop.f32.mrb[0].mxu0
  %v396 = vpop.f32.mrb[0].mxu0
  %v397 = vadd.f32 %v88, %v396
  %v398 = vpop.f32.mrb[0].mxu0
  %399 = vmatprep.mubr.bf16.mxu0 0
  %400 = vmatmul.mubr.bf16.gmra.mrb[0].mxu0 %v267
  %v401 = vpop.f32.mrb[0].mxu0
  %v402 = vadd.f32 %v88, %v401
  %v403 = vpop.f32.mrb[0].mxu0
  %v404 = vpop.f32.mrb[0].mxu0
  %v405 = vadd.f32 %v88, %v404
  %v406 = vpop.f32.mrb[0].mxu0
  %407 = vmatprep.mubr.bf16.mxu0 0
  %408 = vmatmul.mubr.bf16.gmra.mrb[0].mxu0 %v270
  %v409 = vpop.f32.mrb[0].mxu0
  %v410 = vadd.f32 %v88, %v409
  %v411 = vpop.f32.mrb[0].mxu0
  %v412 = vpop.f32.mrb[0].mxu0
  %v413 = vadd.f32 %v88, %v412
  %v414 = vpop.f32.mrb[0].mxu0
  %415 = vmatprep.mubr.bf16.mxu0 0
  %416 = vmatmul.mubr.bf16.gmra.mrb[0].mxu0 %v273
  %v417 = vpop.f32.mrb[0].mxu0
  %v418 = vadd.f32 %v88, %v417
  %v419 = vpop.f32.mrb[0].mxu0
  %v420 = vpop.f32.mrb[0].mxu0
  %v421 = vadd.f32 %v88, %v420
  %v422 = vpop.f32.mrb[0].mxu0
  %423 = vmatprep.mubr.bf16.mxu0 0
  %424 = vmatmul.mubr.bf16.gmra.mrb[0].mxu0 %v276
  %v425 = vpop.f32.mrb[0].mxu0
  %v426 = vadd.f32 %v88, %v425
  %v427 = vpop.f32.mrb[0].mxu0
  %v428 = vpop.f32.mrb[0].mxu0
  %v429 = vadd.f32 %v88, %v428
  %v430 = vpop.f32.mrb[0].mxu0
  %431 = vmatprep.mubr.bf16.mxu0 0
  %432 = vmatmul.mubr.bf16.gmra.mrb[0].mxu0 %v279
  %v433 = vpop.f32.mrb[0].mxu0
  %v434 = vadd.f32 %v88, %v433
  %v435 = vpop.f32.mrb[0].mxu0
  %v436 = vpop.f32.mrb[0].mxu0
  %v437 = vadd.f32 %v88, %v436
  %v438 = vpop.f32.mrb[0].mxu0
  %439 = vmatprep.mubr.bf16.mxu0 0
  %440 = vmatmul.mubr.bf16.gmra.mrb[0].mxu0 %v282
  %v441 = vpop.f32.mrb[0].mxu0
  %v442 = vadd.f32 %v88, %v441
  %v443 = vpop.f32.mrb[0].mxu0
  %v444 = vpop.f32.mrb[0].mxu0
  %v445 = vadd.f32 %v88, %v444
  %v446 = vpop.f32.mrb[0].mxu0
  %447 = vmatprep.mubr.bf16.mxu0 0
  %448 = vmatmul.mubr.bf16.gmra.mrb[0].mxu0 %v285
  %v449 = vpop.f32.mrb[0].mxu0
  %v450 = vadd.f32 %v88, %v449
  %v451 = vpop.f32.mrb[0].mxu0
  %v452 = vpop.f32.mrb[0].mxu0
  %v453 = vadd.f32 %v88, %v452
  %v454 = vpop.f32.mrb[0].mxu0
  %455 = vmatprep.mubr.bf16.mxu0 0
  %456 = vmatmul.mubr.bf16.gmra.mrb[0].mxu0 %v288
  %v457 = vpop.f32.mrb[0].mxu0
  %v458 = vadd.f32 %v88, %v457
  %v459 = vpop.f32.mrb[0].mxu0
  %v460 = vpop.f32.mrb[0].mxu0
  %v461 = vadd.f32 %v88, %v460
  %v462 = vpop.f32.mrb[0].mxu0
  %463 = vmatprep.mubr.bf16.mxu0 0
  %464 = vmatmul.mubr.bf16.gmra.mrb[0].mxu0 %v291
  %v465 = vpop.f32.mrb[0].mxu0
  %v466 = vadd.f32 %v88, %v465
  %v467 = vpop.f32.mrb[0].mxu0
  %v468 = vpop.f32.mrb[0].mxu0
  %v469 = vadd.f32 %v88, %v468
  %v470 = vpop.f32.mrb[0].mxu0
  %471 = vmatprep.mubr.bf16.mxu0 0
  %472 = vmatmul.mubr.bf16.gmra.mrb[0].mxu0 %v294
  %v473 = vpop.f32.mrb[0].mxu0
  %v474 = vadd.f32 %v88, %v473
  %v475 = vpop.f32.mrb[0].mxu0
  %v476 = vpop.f32.mrb[0].mxu0
  %v477 = vadd.f32 %v88, %v476
  %v478 = vpop.f32.mrb[0].mxu0
  %479 = vmatprep.mubr.bf16.mxu0 0
  %480 = vmatmul.mubr.bf16.gmra.mrb[0].mxu0 %v297
  %v481 = vpop.f32.mrb[0].mxu0
  %v482 = vadd.f32 %v88, %v481
  %v483 = vpop.f32.mrb[0].mxu0
  %v484 = vpop.f32.mrb[0].mxu0
  %v485 = vadd.f32 %v88, %v484
  %v486 = vpop.f32.mrb[0].mxu0
  %487 = vmatprep.mubr.bf16.mxu0 0
  %488 = vmatmul.mubr.bf16.gmra.mrb[0].mxu0 %v300
  %v489 = vpop.f32.mrb[0].mxu0
  %v490 = vadd.f32 %v88, %v489
  %v491 = vpop.f32.mrb[0].mxu0
  %v492 = vpop.f32.mrb[0].mxu0
  %v493 = vadd.f32 %v88, %v492
  %v494 = vpop.f32.mrb[0].mxu0
  %495 = vmatprep.mubr.bf16.mxu0 0
  %496 = vmatmul.mubr.bf16.gmra.mrb[0].mxu0 %v303
  %v497 = vpop.f32.mrb[0].mxu0
  %v498 = vadd.f32 %v88, %v497
  %v499 = vpop.f32.mrb[0].mxu0
  %v500 = vpop.f32.mrb[0].mxu0
  %v501 = vadd.f32 %v88, %v500
  %v502 = vpop.f32.mrb[0].mxu0
  %503 = vmatprep.mubr.bf16.mxu0 0
  %504 = vmatmul.mubr.bf16.gmra.mrb[0].mxu0 %v306
  %v505 = vpop.f32.mrb[0].mxu0
  %v506 = vadd.f32 %v88, %v505
  %v507 = vpop.f32.mrb[0].mxu0
  %v508 = vpop.f32.mrb[0].mxu0
  %v509 = vadd.f32 %v88, %v508
  %v510 = vpop.f32.mrb[0].mxu0
  %511 = vmatprep.mubr.bf16.mxu0 0
  %512 = vmatmul.mubr.bf16.gmra.mrb[0].mxu0 %v309
  %v513 = vpop.f32.mrb[0].mxu0
  %v514 = vadd.f32 %v88, %v513
  %v515 = vpop.f32.mrb[0].mxu0
  %v516 = vpop.f32.mrb[0].mxu0
  %v517 = vadd.f32 %v88, %v516
  %v518 = vpop.f32.mrb[0].mxu0
  %519 = vmatprep.mubr.bf16.mxu0 0
  %520 = vmatmul.mubr.bf16.gmra.mrb[0].mxu0 %v312
  %v521 = vpop.f32.mrb[0].mxu0
  %v522 = vadd.f32 %v88, %v521
  %v523 = vpop.f32.mrb[0].mxu0
  %v524 = vpop.f32.mrb[0].mxu0
  %v525 = vadd.f32 %v88, %v524
  %v526 = vpop.f32.mrb[0].mxu0
  %527 = vmatprep.mubr.bf16.mxu0 0
  %528 = vmatmul.mubr.bf16.gmra.mrb[0].mxu0 %v315
  %v529 = vpop.f32.mrb[0].mxu0
  %v530 = vadd.f32 %v88, %v529
  %v531 = vpop.f32.mrb[0].mxu0
  %v532 = vpop.f32.mrb[0].mxu0
  %v533 = vadd.f32 %v88, %v532
  %v534 = vpop.f32.mrb[0].mxu0
  %535 = vmatprep.mubr.bf16.mxu0 0
  %536 = vmatmul.mubr.bf16.gmra.mrb[0].mxu0 %v318
  %v537 = vpop.f32.mrb[0].mxu0
  %v538 = vadd.f32 %v88, %v537
  %v539 = vpop.f32.mrb[0].mxu0
  %v540 = vpop.f32.mrb[0].mxu0
  %v541 = vadd.f32 %v88, %v540
  %v542 = vpop.f32.mrb[0].mxu0
  %543 = vmatprep.mubr.bf16.mxu0 0
  %544 = vmatmul.mubr.bf16.gmra.mrb[0].mxu0 %v321
  %v545 = vpop.f32.mrb[0].mxu0
  %v546 = vadd.f32 %v88, %v545
  %v547 = vpop.f32.mrb[0].mxu0
  %v548 = vpop.f32.mrb[0].mxu0
  %v549 = vadd.f32 %v88, %v548
  %v550 = vpop.f32.mrb[0].mxu0
  %551 = vmatprep.mubr.bf16.mxu0 0
  %552 = vmatmul.mubr.bf16.gmra.mrb[0].mxu0 %v324
  %v553 = vpop.f32.mrb[0].mxu0
  %v554 = vadd.f32 %v88, %v553
  %v555 = vpop.f32.mrb[0].mxu0
  %v556 = vpop.f32.mrb[0].mxu0
  %v557 = vadd.f32 %v88, %v556
  %v558 = vpop.f32.mrb[0].mxu0
  %559 = vmatprep.mubr.bf16.mxu0 0
  %560 = vmatmul.mubr.bf16.gmra.mrb[0].mxu0 %v327
  %v561 = vpop.f32.mrb[0].mxu0
  %v562 = vadd.f32 %v88, %v561
  %v563 = vpop.f32.mrb[0].mxu0
  %v564 = vpop.f32.mrb[0].mxu0
  %v565 = vadd.f32 %v88, %v564
  %v566 = vpop.f32.mrb[0].mxu0
  %567 = vmatprep.mubr.bf16.mxu0 0
  %568 = vmatmul.mubr.bf16.gmra.mrb[0].mxu0 %v330
  %v569 = vpop.f32.mrb[0].mxu0
  %v570 = vadd.f32 %v88, %v569
  %v571 = vpop.f32.mrb[0].mxu0
  %v572 = vpop.f32.mrb[0].mxu0
  %v573 = vadd.f32 %v88, %v572
  %v574 = vpop.f32.mrb[0].mxu0
  %575 = vmatprep.mubr.bf16.mxu0 0
  %576 = vmatmul.mubr.bf16.gmra.mrb[0].mxu0 %v333
  %v577 = vpop.f32.mrb[0].mxu0
  %v578 = vadd.f32 %v88, %v577
  %v579 = vpop.f32.mrb[0].mxu0
  %v580 = vpop.f32.mrb[0].mxu0
  %v581 = vadd.f32 %v88, %v580
  %v582 = vpop.f32.mrb[0].mxu0
  %583 = vmatprep.mubr.bf16.mxu0 0
  %584 = vmatmul.mubr.bf16.gmra.mrb[0].mxu0 %v336
  %v585 = vpop.f32.mrb[0].mxu0
  %v586 = vadd.f32 %v88, %v585
  %v587 = vpop.f32.mrb[0].mxu0
  %v588 = vpop.f32.mrb[0].mxu0
  %v589 = vadd.f32 %v88, %v588
  %v590 = vpop.f32.mrb[0].mxu0
  %591 = vmatprep.mubr.bf16.mxu0 0
  %592 = vmatmul.mubr.bf16.gmra.mrb[0].mxu0 %v339
  %v593 = vpop.f32.mrb[0].mxu0
  %v594 = vadd.f32 %v88, %v593
  %v595 = vpop.f32.mrb[0].mxu0
  %v596 = vpop.f32.mrb[0].mxu0
  %v597 = vadd.f32 %v88, %v596
  %v598 = vpop.f32.mrb[0].mxu0
  %599 = vmatprep.mubr.bf16.mxu0 0
  %600 = vmatmul.mubr.bf16.gmra.mrb[0].mxu0 %v342
  %v601 = vpop.f32.mrb[0].mxu0
  %v602 = vadd.f32 %v88, %v601
  %v603 = vpop.f32.mrb[0].mxu0
  %v604 = vpop.f32.mrb[0].mxu0
  %v605 = vadd.f32 %v88, %v604
  %v606 = vpop.f32.mrb[0].mxu0
  %607 = vmatprep.mubr.bf16.mxu0 0
  %608 = vmatmul.mubr.bf16.gmra.mrb[0].mxu0 %v345
  %v609 = vpop.f32.mrb[0].mxu0
  %v610 = vadd.f32 %v88, %v609
  %v611 = vpop.f32.mrb[0].mxu0
  %v612 = vpop.f32.mrb[0].mxu0
  %v613 = vadd.f32 %v88, %v612
  %v614 = vpop.f32.mrb[0].mxu0
  %615 = vmatprep.mubr.bf16.mxu0 0
  %616 = vmatmul.mubr.bf16.gmra.mrb[0].mxu0 %v348
  %v617 = vpop.f32.mrb[0].mxu0
  %v618 = vadd.f32 %v88, %v617
  %v619 = vpop.f32.mrb[0].mxu0
  %v620 = vpop.f32.mrb[0].mxu0
  %v621 = vadd.f32 %v88, %v620
  %v622 = vpop.f32.mrb[0].mxu0
  %623 = vmatprep.mubr.bf16.mxu0 0
  %624 = vmatmul.mubr.bf16.gmra.mrb[0].mxu0 %v351
  %v625 = vpop.f32.mrb[0].mxu0
  %v626 = vadd.f32 %v88, %v625
  %v627 = vpop.f32.mrb[0].mxu0
  %v628 = vpop.f32.mrb[0].mxu0
  %v629 = vadd.f32 %v88, %v628
  %v630 = vpop.f32.mrb[0].mxu0
  %631 = vmatprep.mubr.bf16.mxu0 0
  %632 = vmatmul.mubr.bf16.gmra.mrb[0].mxu0 %v354
  %v633 = vpop.f32.mrb[0].mxu0
  %v634 = vadd.f32 %v88, %v633
  %v635 = vpop.f32.mrb[0].mxu0
  %v636 = vpop.f32.mrb[0].mxu0
  %v637 = vadd.f32 %v88, %v636
  %v638 = vpop.f32.mrb[0].mxu0
  %639 = vmatprep.mubr.bf16.mxu0 0
  %640 = vmatmul.mubr.bf16.gmra.mrb[0].mxu0 %v357
  %v641 = vpop.f32.mrb[0].mxu0
  %v642 = vadd.f32 %v88, %v641
  %v643 = vpop.f32.mrb[0].mxu0
  %v644 = vpop.f32.mrb[0].mxu0
  %v645 = vadd.f32 %v88, %v644
  %v646 = vpop.f32.mrb[0].mxu0
  %647 = vdwg.mxu0
  %v648 = vxor.u32 %v394, 2147483648
  %v649 = vxor.u32 %v397, 2147483648
  %v650 = vxor.u32 %v402, 2147483648
  %v651 = vxor.u32 %v405, 2147483648
  %v652 = vxor.u32 %v410, 2147483648
  %v653 = vxor.u32 %v413, 2147483648
  %v654 = vxor.u32 %v418, 2147483648
  %v655 = vxor.u32 %v421, 2147483648
  %v656 = vxor.u32 %v426, 2147483648
  %v657 = vxor.u32 %v429, 2147483648
  %v658 = vxor.u32 %v434, 2147483648
  %v659 = vxor.u32 %v437, 2147483648
  %v660 = vxor.u32 %v442, 2147483648
  %v661 = vxor.u32 %v445, 2147483648
  %v662 = vxor.u32 %v450, 2147483648
  %v663 = vxor.u32 %v453, 2147483648
  %v664 = vxor.u32 %v458, 2147483648
  %v665 = vxor.u32 %v461, 2147483648
  %v666 = vxor.u32 %v466, 2147483648
  %v667 = vxor.u32 %v469, 2147483648
  %v668 = vxor.u32 %v474, 2147483648
  %v669 = vxor.u32 %v477, 2147483648
  %v670 = vxor.u32 %v482, 2147483648
  %v671 = vxor.u32 %v485, 2147483648
  %v672 = vxor.u32 %v490, 2147483648
  %v673 = vxor.u32 %v493, 2147483648
  %v674 = vxor.u32 %v498, 2147483648
  %v675 = vxor.u32 %v501, 2147483648
  %v676 = vxor.u32 %v506, 2147483648
  %v677 = vxor.u32 %v509, 2147483648
  %v678 = vxor.u32 %v514, 2147483648
  %v679 = vxor.u32 %v517, 2147483648
  %v680 = vxor.u32 %v522, 2147483648
  %v681 = vxor.u32 %v525, 2147483648
  %v682 = vxor.u32 %v530, 2147483648
  %v683 = vxor.u32 %v533, 2147483648
  %v684 = vxor.u32 %v538, 2147483648
  %v685 = vxor.u32 %v541, 2147483648
  %v686 = vxor.u32 %v546, 2147483648
  %v687 = vxor.u32 %v549, 2147483648
  %v688 = vxor.u32 %v554, 2147483648
  %v689 = vxor.u32 %v557, 2147483648
  %v690 = vxor.u32 %v562, 2147483648
  %v691 = vxor.u32 %v565, 2147483648
  %v692 = vxor.u32 %v570, 2147483648
  %v693 = vxor.u32 %v573, 2147483648
  %v694 = vxor.u32 %v578, 2147483648
  %v695 = vxor.u32 %v581, 2147483648
  %v696 = vxor.u32 %v586, 2147483648
  %v697 = vxor.u32 %v589, 2147483648
  %v698 = vxor.u32 %v594, 2147483648
  %v699 = vxor.u32 %v597, 2147483648
  %v700 = vxor.u32 %v602, 2147483648
  %v701 = vxor.u32 %v605, 2147483648
  %v702 = vxor.u32 %v610, 2147483648
  %v703 = vxor.u32 %v613, 2147483648
  %v704 = vxor.u32 %v618, 2147483648
  %v705 = vxor.u32 %v621, 2147483648
  %v706 = vxor.u32 %v626, 2147483648
  %v707 = vxor.u32 %v629, 2147483648
  %v708 = vxor.u32 %v634, 2147483648
  %v709 = vxor.u32 %v637, 2147483648
  %v710 = vxor.u32 %v642, 2147483648
  %v711 = vxor.u32 %v645, 2147483648
  %v712 = vmul.f32 %v648, 1.442695
  %v713 = vpow.pop %v712
  %v714 = vmul.f32 %v649, 1.442695
  %v715 = vpow.pop %v714
  %v716 = vmul.f32 %v650, 1.442695
  %v717 = vpow.pop %v716
  %v718 = vmul.f32 %v651, 1.442695
  %v719 = vpow.pop %v718
  %v720 = vmul.f32 %v652, 1.442695
  %v721 = vpow.pop %v720
  %v722 = vmul.f32 %v653, 1.442695
  %v723 = vpow.pop %v722
  %v724 = vmul.f32 %v654, 1.442695
  %v725 = vpow.pop %v724
  %v726 = vmul.f32 %v655, 1.442695
  %v727 = vpow.pop %v726
  %v728 = vmul.f32 %v656, 1.442695
  %v729 = vpow.pop %v728
  %v730 = vmul.f32 %v657, 1.442695
  %v731 = vpow.pop %v730
  %v732 = vmul.f32 %v658, 1.442695
  %v733 = vpow.pop %v732
  %v734 = vmul.f32 %v659, 1.442695
  %v735 = vpow.pop %v734
  %v736 = vmul.f32 %v660, 1.442695
  %v737 = vpow.pop %v736
  %v738 = vmul.f32 %v661, 1.442695
  %v739 = vpow.pop %v738
  %v740 = vmul.f32 %v662, 1.442695
  %v741 = vpow.pop %v740
  %v742 = vmul.f32 %v663, 1.442695
  %v743 = vpow.pop %v742
  %v744 = vmul.f32 %v664, 1.442695
  %v745 = vpow.pop %v744
  %v746 = vmul.f32 %v665, 1.442695
  %v747 = vpow.pop %v746
  %v748 = vmul.f32 %v666, 1.442695
  %v749 = vpow.pop %v748
  %v750 = vmul.f32 %v667, 1.442695
  %v751 = vpow.pop %v750
  %v752 = vmul.f32 %v668, 1.442695
  %v753 = vpow.pop %v752
  %v754 = vmul.f32 %v669, 1.442695
  %v755 = vpow.pop %v754
  %v756 = vmul.f32 %v670, 1.442695
  %v757 = vpow.pop %v756
  %v758 = vmul.f32 %v671, 1.442695
  %v759 = vpow.pop %v758
  %v760 = vmul.f32 %v672, 1.442695
  %v761 = vpow.pop %v760
  %v762 = vmul.f32 %v673, 1.442695
  %v763 = vpow.pop %v762
  %v764 = vmul.f32 %v674, 1.442695
  %v765 = vpow.pop %v764
  %v766 = vmul.f32 %v675, 1.442695
  %v767 = vpow.pop %v766
  %v768 = vmul.f32 %v676, 1.442695
  %v769 = vpow.pop %v768
  %v770 = vmul.f32 %v677, 1.442695
  %v771 = vpow.pop %v770
  %v772 = vmul.f32 %v678, 1.442695
  %v773 = vpow.pop %v772
  %v774 = vmul.f32 %v679, 1.442695
  %v775 = vpow.pop %v774
  %v776 = vmul.f32 %v680, 1.442695
  %v777 = vpow.pop %v776
  %v778 = vmul.f32 %v681, 1.442695
  %v779 = vpow.pop %v778
  %v780 = vmul.f32 %v682, 1.442695
  %v781 = vpow.pop %v780
  %v782 = vmul.f32 %v683, 1.442695
  %v783 = vpow.pop %v782
  %v784 = vmul.f32 %v684, 1.442695
  %v785 = vpow.pop %v784
  %v786 = vmul.f32 %v685, 1.442695
  %v787 = vpow.pop %v786
  %v788 = vmul.f32 %v686, 1.442695
  %v789 = vpow.pop %v788
  %v790 = vmul.f32 %v687, 1.442695
  %v791 = vpow.pop %v790
  %v792 = vmul.f32 %v688, 1.442695
  %v793 = vpow.pop %v792
  %v794 = vmul.f32 %v689, 1.442695
  %v795 = vpow.pop %v794
  %v796 = vmul.f32 %v690, 1.442695
  %v797 = vpow.pop %v796
  %v798 = vmul.f32 %v691, 1.442695
  %v799 = vpow.pop %v798
  %v800 = vmul.f32 %v692, 1.442695
  %v801 = vpow.pop %v800
  %v802 = vmul.f32 %v693, 1.442695
  %v803 = vpow.pop %v802
  %v804 = vmul.f32 %v694, 1.442695
  %v805 = vpow.pop %v804
  %v806 = vmul.f32 %v695, 1.442695
  %v807 = vpow.pop %v806
  %v808 = vmul.f32 %v696, 1.442695
  %v809 = vpow.pop %v808
  %v810 = vmul.f32 %v697, 1.442695
  %v811 = vpow.pop %v810
  %v812 = vmul.f32 %v698, 1.442695
  %v813 = vpow.pop %v812
  %v814 = vmul.f32 %v699, 1.442695
  %v815 = vpow.pop %v814
  %v816 = vmul.f32 %v700, 1.442695
  %v817 = vpow.pop %v816
  %v818 = vmul.f32 %v701, 1.442695
  %v819 = vpow.pop %v818
  %v820 = vmul.f32 %v702, 1.442695
  %v821 = vpow.pop %v820
  %v822 = vmul.f32 %v703, 1.442695
  %v823 = vpow.pop %v822
  %v824 = vmul.f32 %v704, 1.442695
  %v825 = vpow.pop %v824
  %v826 = vmul.f32 %v705, 1.442695
  %v827 = vpow.pop %v826
  %v828 = vmul.f32 %v706, 1.442695
  %v829 = vpow.pop %v828
  %v830 = vmul.f32 %v707, 1.442695
  %v831 = vpow.pop %v830
  %v832 = vmul.f32 %v708, 1.442695
  %v833 = vpow.pop %v832
  %v834 = vmul.f32 %v709, 1.442695
  %v835 = vpow.pop %v834
  %v836 = vmul.f32 %v710, 1.442695
  %v837 = vpow.pop %v836
  %v838 = vmul.f32 %v711, 1.442695
  %v839 = vpow.pop %v838
  %v840 = vadd.f32 %v713, 1.0
  %v841 = vadd.f32 %v715, 1.0
  %v842 = vadd.f32 %v717, 1.0
  %v843 = vadd.f32 %v719, 1.0
  %v844 = vadd.f32 %v721, 1.0
  %v845 = vadd.f32 %v723, 1.0
  %v846 = vadd.f32 %v725, 1.0
  %v847 = vadd.f32 %v727, 1.0
  %v848 = vadd.f32 %v729, 1.0
  %v849 = vadd.f32 %v731, 1.0
  %v850 = vadd.f32 %v733, 1.0
  %v851 = vadd.f32 %v735, 1.0
  %v852 = vadd.f32 %v737, 1.0
  %v853 = vadd.f32 %v739, 1.0
  %v854 = vadd.f32 %v741, 1.0
  %v855 = vadd.f32 %v743, 1.0
  %v856 = vadd.f32 %v745, 1.0
  %v857 = vadd.f32 %v747, 1.0
  %v858 = vadd.f32 %v749, 1.0
  %v859 = vadd.f32 %v751, 1.0
  %v860 = vadd.f32 %v753, 1.0
  %v861 = vadd.f32 %v755, 1.0
  %v862 = vadd.f32 %v757, 1.0
  %v863 = vadd.f32 %v759, 1.0
  %v864 = vadd.f32 %v761, 1.0
  %v865 = vadd.f32 %v763, 1.0
  %v866 = vadd.f32 %v765, 1.0
  %v867 = vadd.f32 %v767, 1.0
  %v868 = vadd.f32 %v769, 1.0
  %v869 = vadd.f32 %v771, 1.0
  %v870 = vadd.f32 %v773, 1.0
  %v871 = vadd.f32 %v775, 1.0
  %v872 = vadd.f32 %v777, 1.0
  %v873 = vadd.f32 %v779, 1.0
  %v874 = vadd.f32 %v781, 1.0
  %v875 = vadd.f32 %v783, 1.0
  %v876 = vadd.f32 %v785, 1.0
  %v877 = vadd.f32 %v787, 1.0
  %v878 = vadd.f32 %v789, 1.0
  %v879 = vadd.f32 %v791, 1.0
  %v880 = vadd.f32 %v793, 1.0
  %v881 = vadd.f32 %v795, 1.0
  %v882 = vadd.f32 %v797, 1.0
  %v883 = vadd.f32 %v799, 1.0
  %v884 = vadd.f32 %v801, 1.0
  %v885 = vadd.f32 %v803, 1.0
  %v886 = vadd.f32 %v805, 1.0
  %v887 = vadd.f32 %v807, 1.0
  %v888 = vadd.f32 %v809, 1.0
  %v889 = vadd.f32 %v811, 1.0
  %v890 = vadd.f32 %v813, 1.0
  %v891 = vadd.f32 %v815, 1.0
  %v892 = vadd.f32 %v817, 1.0
  %v893 = vadd.f32 %v819, 1.0
  %v894 = vadd.f32 %v821, 1.0
  %v895 = vadd.f32 %v823, 1.0
  %v896 = vadd.f32 %v825, 1.0
  %v897 = vadd.f32 %v827, 1.0
  %v898 = vadd.f32 %v829, 1.0
  %v899 = vadd.f32 %v831, 1.0
  %v900 = vadd.f32 %v833, 1.0
  %v901 = vadd.f32 %v835, 1.0
  %v902 = vadd.f32 %v837, 1.0
  %v903 = vadd.f32 %v839, 1.0
  %v904 = vrcp.pop %v840
  %v905 = vmul.f32 1.0, %v904
  %v906 = vrcp.pop %v841
  %v907 = vmul.f32 1.0, %v906
  %v908 = vrcp.pop %v842
  %v909 = vmul.f32 1.0, %v908
  %v910 = vrcp.pop %v843
  %v911 = vmul.f32 1.0, %v910
  %v912 = vrcp.pop %v844
  %v913 = vmul.f32 1.0, %v912
  %v914 = vrcp.pop %v845
  %v915 = vmul.f32 1.0, %v914
  %v916 = vrcp.pop %v846
  %v917 = vmul.f32 1.0, %v916
  %v918 = vrcp.pop %v847
  %v919 = vmul.f32 1.0, %v918
  %v920 = vrcp.pop %v848
  %v921 = vmul.f32 1.0, %v920
  %v922 = vrcp.pop %v849
  %v923 = vmul.f32 1.0, %v922
  %v924 = vrcp.pop %v850
  %v925 = vmul.f32 1.0, %v924
  %v926 = vrcp.pop %v851
  %v927 = vmul.f32 1.0, %v926
  %v928 = vrcp.pop %v852
  %v929 = vmul.f32 1.0, %v928
  %v930 = vrcp.pop %v853
  %v931 = vmul.f32 1.0, %v930
  %v932 = vrcp.pop %v854
  %v933 = vmul.f32 1.0, %v932
  %v934 = vrcp.pop %v855
  %v935 = vmul.f32 1.0, %v934
  %v936 = vrcp.pop %v856
  %v937 = vmul.f32 1.0, %v936
  %v938 = vrcp.pop %v857
  %v939 = vmul.f32 1.0, %v938
  %v940 = vrcp.pop %v858
  %v941 = vmul.f32 1.0, %v940
  %v942 = vrcp.pop %v859
  %v943 = vmul.f32 1.0, %v942
  %v944 = vrcp.pop %v860
  %v945 = vmul.f32 1.0, %v944
  %v946 = vrcp.pop %v861
  %v947 = vmul.f32 1.0, %v946
  %v948 = vrcp.pop %v862
  %v949 = vmul.f32 1.0, %v948
  %v950 = vrcp.pop %v863
  %v951 = vmul.f32 1.0, %v950
  %v952 = vrcp.pop %v864
  %v953 = vmul.f32 1.0, %v952
  %v954 = vrcp.pop %v865
  %v955 = vmul.f32 1.0, %v954
  %v956 = vrcp.pop %v866
  %v957 = vmul.f32 1.0, %v956
  %v958 = vrcp.pop %v867
  %v959 = vmul.f32 1.0, %v958
  %v960 = vrcp.pop %v868
  %v961 = vmul.f32 1.0, %v960
  %v962 = vrcp.pop %v869
  %v963 = vmul.f32 1.0, %v962
  %v964 = vrcp.pop %v870
  %v965 = vmul.f32 1.0, %v964
  %v966 = vrcp.pop %v871
  %v967 = vmul.f32 1.0, %v966
  %v968 = vrcp.pop %v872
  %v969 = vmul.f32 1.0, %v968
  %v970 = vrcp.pop %v873
  %v971 = vmul.f32 1.0, %v970
  %v972 = vrcp.pop %v874
  %v973 = vmul.f32 1.0, %v972
  %v974 = vrcp.pop %v875
  %v975 = vmul.f32 1.0, %v974
  %v976 = vrcp.pop %v876
  %v977 = vmul.f32 1.0, %v976
  %v978 = vrcp.pop %v877
  %v979 = vmul.f32 1.0, %v978
  %v980 = vrcp.pop %v878
  %v981 = vmul.f32 1.0, %v980
  %v982 = vrcp.pop %v879
  %v983 = vmul.f32 1.0, %v982
  %v984 = vrcp.pop %v880
  %v985 = vmul.f32 1.0, %v984
  %v986 = vrcp.pop %v881
  %v987 = vmul.f32 1.0, %v986
  %v988 = vrcp.pop %v882
  %v989 = vmul.f32 1.0, %v988
  %v990 = vrcp.pop %v883
  %v991 = vmul.f32 1.0, %v990
  %v992 = vrcp.pop %v884
  %v993 = vmul.f32 1.0, %v992
  %v994 = vrcp.pop %v885
  %v995 = vmul.f32 1.0, %v994
  %v996 = vrcp.pop %v886
  %v997 = vmul.f32 1.0, %v996
  %v998 = vrcp.pop %v887
  %v999 = vmul.f32 1.0, %v998
  %v1000 = vrcp.pop %v888
  %v1001 = vmul.f32 1.0, %v1000
  %v1002 = vrcp.pop %v889
  %v1003 = vmul.f32 1.0, %v1002
  %v1004 = vrcp.pop %v890
  %v1005 = vmul.f32 1.0, %v1004
  %v1006 = vrcp.pop %v891
  %v1007 = vmul.f32 1.0, %v1006
  %v1008 = vrcp.pop %v892
  %v1009 = vmul.f32 1.0, %v1008
  %v1010 = vrcp.pop %v893
  %v1011 = vmul.f32 1.0, %v1010
  %v1012 = vrcp.pop %v894
  %v1013 = vmul.f32 1.0, %v1012
  %v1014 = vrcp.pop %v895
  %v1015 = vmul.f32 1.0, %v1014
  %v1016 = vrcp.pop %v896
  %v1017 = vmul.f32 1.0, %v1016
  %v1018 = vrcp.pop %v897
  %v1019 = vmul.f32 1.0, %v1018
  %v1020 = vrcp.pop %v898
  %v1021 = vmul.f32 1.0, %v1020
  %v1022 = vrcp.pop %v899
  %v1023 = vmul.f32 1.0, %v1022
  %v1024 = vrcp.pop %v900
  %v1025 = vmul.f32 1.0, %v1024
  %v1026 = vrcp.pop %v901
  %v1027 = vmul.f32 1.0, %v1026
  %v1028 = vrcp.pop %v902
  %v1029 = vmul.f32 1.0, %v1028
  %v1030 = vrcp.pop %v903
  %v1031 = vmul.f32 1.0, %v1030
  %v1032 = vmul.f32 %v394, %v905
  %v1033 = vmul.f32 %v397, %v907
  %v1034 = vmul.f32 %v402, %v909
  %v1035 = vmul.f32 %v405, %v911
  %v1036 = vmul.f32 %v410, %v913
  %v1037 = vmul.f32 %v413, %v915
  %v1038 = vmul.f32 %v418, %v917
  %v1039 = vmul.f32 %v421, %v919
  %v1040 = vmul.f32 %v426, %v921
  %v1041 = vmul.f32 %v429, %v923
  %v1042 = vmul.f32 %v434, %v925
  %v1043 = vmul.f32 %v437, %v927
  %v1044 = vmul.f32 %v442, %v929
  %v1045 = vmul.f32 %v445, %v931
  %v1046 = vmul.f32 %v450, %v933
  %v1047 = vmul.f32 %v453, %v935
  %v1048 = vmul.f32 %v458, %v937
  %v1049 = vmul.f32 %v461, %v939
  %v1050 = vmul.f32 %v466, %v941
  %v1051 = vmul.f32 %v469, %v943
  %v1052 = vmul.f32 %v474, %v945
  %v1053 = vmul.f32 %v477, %v947
  %v1054 = vmul.f32 %v482, %v949
  %v1055 = vmul.f32 %v485, %v951
  %v1056 = vmul.f32 %v490, %v953
  %v1057 = vmul.f32 %v493, %v955
  %v1058 = vmul.f32 %v498, %v957
  %v1059 = vmul.f32 %v501, %v959
  %v1060 = vmul.f32 %v506, %v961
  %v1061 = vmul.f32 %v509, %v963
  %v1062 = vmul.f32 %v514, %v965
  %v1063 = vmul.f32 %v517, %v967
  %v1064 = vmul.f32 %v522, %v969
  %v1065 = vmul.f32 %v525, %v971
  %v1066 = vmul.f32 %v530, %v973
  %v1067 = vmul.f32 %v533, %v975
  %v1068 = vmul.f32 %v538, %v977
  %v1069 = vmul.f32 %v541, %v979
  %v1070 = vmul.f32 %v546, %v981
  %v1071 = vmul.f32 %v549, %v983
  %v1072 = vmul.f32 %v554, %v985
  %v1073 = vmul.f32 %v557, %v987
  %v1074 = vmul.f32 %v562, %v989
  %v1075 = vmul.f32 %v565, %v991
  %v1076 = vmul.f32 %v570, %v993
  %v1077 = vmul.f32 %v573, %v995
  %v1078 = vmul.f32 %v578, %v997
  %v1079 = vmul.f32 %v581, %v999
  %v1080 = vmul.f32 %v586, %v1001
  %v1081 = vmul.f32 %v589, %v1003
  %v1082 = vmul.f32 %v594, %v1005
  %v1083 = vmul.f32 %v597, %v1007
  %v1084 = vmul.f32 %v602, %v1009
  %v1085 = vmul.f32 %v605, %v1011
  %v1086 = vmul.f32 %v610, %v1013
  %v1087 = vmul.f32 %v613, %v1015
  %v1088 = vmul.f32 %v618, %v1017
  %v1089 = vmul.f32 %v621, %v1019
  %v1090 = vmul.f32 %v626, %v1021
  %v1091 = vmul.f32 %v629, %v1023
  %v1092 = vmul.f32 %v634, %v1025
  %v1093 = vmul.f32 %v637, %v1027
  %v1094 = vmul.f32 %v642, %v1029
  %v1095 = vmul.f32 %v645, %v1031
  %v1096 = vpack.c.bf16 %v1033, %v1032
  %v1097 = vpack.c.bf16 %v1035, %v1034
  %v1098 = vpack.c.bf16 %v1037, %v1036
  %v1099 = vpack.c.bf16 %v1039, %v1038
  %v1100 = vpack.c.bf16 %v1041, %v1040
  %v1101 = vpack.c.bf16 %v1043, %v1042
  %v1102 = vpack.c.bf16 %v1045, %v1044
  %v1103 = vpack.c.bf16 %v1047, %v1046
  %v1104 = vpack.c.bf16 %v1049, %v1048
  %v1105 = vpack.c.bf16 %v1051, %v1050
  %v1106 = vpack.c.bf16 %v1053, %v1052
  %v1107 = vpack.c.bf16 %v1055, %v1054
  %v1108 = vpack.c.bf16 %v1057, %v1056
  %v1109 = vpack.c.bf16 %v1059, %v1058
  %v1110 = vpack.c.bf16 %v1061, %v1060
  %v1111 = vpack.c.bf16 %v1063, %v1062
  %v1112 = vpack.c.bf16 %v1065, %v1064
  %v1113 = vpack.c.bf16 %v1067, %v1066
  %v1114 = vpack.c.bf16 %v1069, %v1068
  %v1115 = vpack.c.bf16 %v1071, %v1070
  %v1116 = vpack.c.bf16 %v1073, %v1072
  %v1117 = vpack.c.bf16 %v1075, %v1074
  %v1118 = vpack.c.bf16 %v1077, %v1076
  %v1119 = vpack.c.bf16 %v1079, %v1078
  %v1120 = vpack.c.bf16 %v1081, %v1080
  %v1121 = vpack.c.bf16 %v1083, %v1082
  %v1122 = vpack.c.bf16 %v1085, %v1084
  %v1123 = vpack.c.bf16 %v1087, %v1086
  %v1124 = vpack.c.bf16 %v1089, %v1088
  %v1125 = vpack.c.bf16 %v1091, %v1090
  %v1126 = vpack.c.bf16 %v1093, %v1092
  %v1127 = vpack.c.bf16 %v1095, %v1094
  %v1160 = vunpack.c.l.b16 %v1096
  %v1161 = vunpack.c.h.b16 %v1096
  %v1162 = vunpack.c.l.b16 %v1097
  %v1163 = vunpack.c.h.b16 %v1097
  %v1164 = vunpack.c.l.b16 %v1098
  %v1165 = vunpack.c.h.b16 %v1098
  %v1166 = vunpack.c.l.b16 %v1099
  %v1167 = vunpack.c.h.b16 %v1099
  %v1168 = vunpack.c.l.b16 %v1100
  %v1169 = vunpack.c.h.b16 %v1100
  %v1170 = vunpack.c.l.b16 %v1101
  %v1171 = vunpack.c.h.b16 %v1101
  %v1172 = vunpack.c.l.b16 %v1102
  %v1173 = vunpack.c.h.b16 %v1102
  %v1174 = vunpack.c.l.b16 %v1103
  %v1175 = vunpack.c.h.b16 %v1103
  %v1176 = vunpack.c.l.b16 %v1104
  %v1177 = vunpack.c.h.b16 %v1104
  %v1178 = vunpack.c.l.b16 %v1105
  %v1179 = vunpack.c.h.b16 %v1105
  %v1180 = vunpack.c.l.b16 %v1106
  %v1181 = vunpack.c.h.b16 %v1106
  %v1182 = vunpack.c.l.b16 %v1107
  %v1183 = vunpack.c.h.b16 %v1107
  %v1184 = vunpack.c.l.b16 %v1108
  %v1185 = vunpack.c.h.b16 %v1108
  %v1186 = vunpack.c.l.b16 %v1109
  %v1187 = vunpack.c.h.b16 %v1109
  %v1188 = vunpack.c.l.b16 %v1110
  %v1189 = vunpack.c.h.b16 %v1110
  %v1190 = vunpack.c.l.b16 %v1111
  %v1191 = vunpack.c.h.b16 %v1111
  %v1192 = vunpack.c.l.b16 %v1112
  %v1193 = vunpack.c.h.b16 %v1112
  %v1194 = vunpack.c.l.b16 %v1113
  %v1195 = vunpack.c.h.b16 %v1113
  %v1196 = vunpack.c.l.b16 %v1114
  %v1197 = vunpack.c.h.b16 %v1114
  %v1198 = vunpack.c.l.b16 %v1115
  %v1199 = vunpack.c.h.b16 %v1115
  %v1200 = vunpack.c.l.b16 %v1116
  %v1201 = vunpack.c.h.b16 %v1116
  %v1202 = vunpack.c.l.b16 %v1117
  %v1203 = vunpack.c.h.b16 %v1117
  %v1204 = vunpack.c.l.b16 %v1118
  %v1205 = vunpack.c.h.b16 %v1118
  %v1206 = vunpack.c.l.b16 %v1119
  %v1207 = vunpack.c.h.b16 %v1119
  %v1208 = vunpack.c.l.b16 %v1120
  %v1209 = vunpack.c.h.b16 %v1120
  %v1210 = vunpack.c.l.b16 %v1121
  %v1211 = vunpack.c.h.b16 %v1121
  %v1212 = vunpack.c.l.b16 %v1122
  %v1213 = vunpack.c.h.b16 %v1122
  %v1214 = vunpack.c.l.b16 %v1123
  %v1215 = vunpack.c.h.b16 %v1123
  %v1216 = vunpack.c.l.b16 %v1124
  %v1217 = vunpack.c.h.b16 %v1124
  %v1218 = vunpack.c.l.b16 %v1125
  %v1219 = vunpack.c.h.b16 %v1125
  %v1220 = vunpack.c.l.b16 %v1126
  %v1221 = vunpack.c.h.b16 %v1126
  %v1222 = vunpack.c.l.b16 %v1127
  %v1223 = vunpack.c.h.b16 %v1127
  %v1224 = vpack.c.b16 %v1160, %v1160
  %v1225 = vpack.c.b16 %v1161, %v1161
  %v1226 = vpack.c.b16 %v1162, %v1162
  %v1227 = vpack.c.b16 %v1163, %v1163
  %v1228 = vpack.c.b16 %v1164, %v1164
  %v1229 = vpack.c.b16 %v1165, %v1165
  %v1230 = vpack.c.b16 %v1166, %v1166
  %v1231 = vpack.c.b16 %v1167, %v1167
  %v1232 = vpack.c.b16 %v1168, %v1168
  %v1233 = vpack.c.b16 %v1169, %v1169
  %v1234 = vpack.c.b16 %v1170, %v1170
  %v1235 = vpack.c.b16 %v1171, %v1171
  %v1236 = vpack.c.b16 %v1172, %v1172
  %v1237 = vpack.c.b16 %v1173, %v1173
  %v1238 = vpack.c.b16 %v1174, %v1174
  %v1239 = vpack.c.b16 %v1175, %v1175
  %v1240 = vpack.c.b16 %v1176, %v1176
  %v1241 = vpack.c.b16 %v1177, %v1177
  %v1242 = vpack.c.b16 %v1178, %v1178
  %v1243 = vpack.c.b16 %v1179, %v1179
  %v1244 = vpack.c.b16 %v1180, %v1180
  %v1245 = vpack.c.b16 %v1181, %v1181
  %v1246 = vpack.c.b16 %v1182, %v1182
  %v1247 = vpack.c.b16 %v1183, %v1183
  %v1248 = vpack.c.b16 %v1184, %v1184
  %v1249 = vpack.c.b16 %v1185, %v1185
  %v1250 = vpack.c.b16 %v1186, %v1186
  %v1251 = vpack.c.b16 %v1187, %v1187
  %v1252 = vpack.c.b16 %v1188, %v1188
  %v1253 = vpack.c.b16 %v1189, %v1189
  %v1254 = vpack.c.b16 %v1190, %v1190
  %v1255 = vpack.c.b16 %v1191, %v1191
  %v1256 = vpack.c.b16 %v1192, %v1192
  %v1257 = vpack.c.b16 %v1193, %v1193
  %v1258 = vpack.c.b16 %v1194, %v1194
  %v1259 = vpack.c.b16 %v1195, %v1195
  %v1260 = vpack.c.b16 %v1196, %v1196
  %v1261 = vpack.c.b16 %v1197, %v1197
  %v1262 = vpack.c.b16 %v1198, %v1198
  %v1263 = vpack.c.b16 %v1199, %v1199
  %v1264 = vpack.c.b16 %v1200, %v1200
  %v1265 = vpack.c.b16 %v1201, %v1201
  %v1266 = vpack.c.b16 %v1202, %v1202
  %v1267 = vpack.c.b16 %v1203, %v1203
  %v1268 = vpack.c.b16 %v1204, %v1204
  %v1269 = vpack.c.b16 %v1205, %v1205
  %v1270 = vpack.c.b16 %v1206, %v1206
  %v1271 = vpack.c.b16 %v1207, %v1207
  %v1272 = vpack.c.b16 %v1208, %v1208
  %v1273 = vpack.c.b16 %v1209, %v1209
  %v1274 = vpack.c.b16 %v1210, %v1210
  %v1275 = vpack.c.b16 %v1211, %v1211
  %v1276 = vpack.c.b16 %v1212, %v1212
  %v1277 = vpack.c.b16 %v1213, %v1213
  %v1278 = vpack.c.b16 %v1214, %v1214
  %v1279 = vpack.c.b16 %v1215, %v1215
  %v1280 = vpack.c.b16 %v1216, %v1216
  %v1281 = vpack.c.b16 %v1217, %v1217
  %v1282 = vpack.c.b16 %v1218, %v1218
  %v1283 = vpack.c.b16 %v1219, %v1219
  %v1284 = vpack.c.b16 %v1220, %v1220
  %v1285 = vpack.c.b16 %v1221, %v1221
  %v1286 = vpack.c.b16 %v1222, %v1222
  %v1287 = vpack.c.b16 %v1223, %v1223
  %vm1352 = vcmask 257024
  %1353 = vst.msk [vmem:[%s3] sm:$0xf] %vm1352, %v1224
  %1354 = vst.msk [vmem:[%s3 + $0x4] sm:$0xf] %vm1352, %v1225
  %1355 = vst.msk [vmem:[%s3 + $0x8] sm:$0xf] %vm1352, %v1226
  %1356 = vst.msk [vmem:[%s3 + $0xc] sm:$0xf] %vm1352, %v1227
  %1357 = vst.msk [vmem:[%s3 + $0x10] sm:$0xf] %vm1352, %v1228
  %1358 = vst.msk [vmem:[%s3 + $0x14] sm:$0xf] %vm1352, %v1229
  %1359 = vst.msk [vmem:[%s3 + $0x18] sm:$0xf] %vm1352, %v1230
  %1360 = vst.msk [vmem:[%s3 + $0x1c] sm:$0xf] %vm1352, %v1231
  %1361 = vst.msk [vmem:[%s3 + $0x20] sm:$0xf] %vm1352, %v1232
  %1362 = vst.msk [vmem:[%s3 + $0x24] sm:$0xf] %vm1352, %v1233
  %1363 = vst.msk [vmem:[%s3 + $0x28] sm:$0xf] %vm1352, %v1234
  %1364 = vst.msk [vmem:[%s3 + $0x2c] sm:$0xf] %vm1352, %v1235
  %1365 = vst.msk [vmem:[%s3 + $0x30] sm:$0xf] %vm1352, %v1236
  %1366 = vst.msk [vmem:[%s3 + $0x34] sm:$0xf] %vm1352, %v1237
  %1367 = vst.msk [vmem:[%s3 + $0x38] sm:$0xf] %vm1352, %v1238
  %1368 = vst.msk [vmem:[%s3 + $0x3c] sm:$0xf] %vm1352, %v1239
  %1369 = vst.msk [vmem:[%s3 + $0x40] sm:$0xf] %vm1352, %v1240
  %1370 = vst.msk [vmem:[%s3 + $0x44] sm:$0xf] %vm1352, %v1241
  %1371 = vst.msk [vmem:[%s3 + $0x48] sm:$0xf] %vm1352, %v1242
  %1372 = vst.msk [vmem:[%s3 + $0x4c] sm:$0xf] %vm1352, %v1243
  %1373 = vst.msk [vmem:[%s3 + $0x50] sm:$0xf] %vm1352, %v1244
  %1374 = vst.msk [vmem:[%s3 + $0x54] sm:$0xf] %vm1352, %v1245
  %1375 = vst.msk [vmem:[%s3 + $0x58] sm:$0xf] %vm1352, %v1246
  %1376 = vst.msk [vmem:[%s3 + $0x5c] sm:$0xf] %vm1352, %v1247
  %1377 = vst.msk [vmem:[%s3 + $0x60] sm:$0xf] %vm1352, %v1248
  %1378 = vst.msk [vmem:[%s3 + $0x64] sm:$0xf] %vm1352, %v1249
  %1379 = vst.msk [vmem:[%s3 + $0x68] sm:$0xf] %vm1352, %v1250
  %1380 = vst.msk [vmem:[%s3 + $0x6c] sm:$0xf] %vm1352, %v1251
  %1381 = vst.msk [vmem:[%s3 + $0x70] sm:$0xf] %vm1352, %v1252
  %1382 = vst.msk [vmem:[%s3 + $0x74] sm:$0xf] %vm1352, %v1253
  %1383 = vst.msk [vmem:[%s3 + $0x78] sm:$0xf] %vm1352, %v1254
  %1384 = vst.msk [vmem:[%s3 + $0x7c] sm:$0xf] %vm1352, %v1255
  %1385 = vst.msk [vmem:[%s3 + $0x80] sm:$0xf] %vm1352, %v1256
  %1386 = vst.msk [vmem:[%s3 + $0x84] sm:$0xf] %vm1352, %v1257
  %1387 = vst.msk [vmem:[%s3 + $0x88] sm:$0xf] %vm1352, %v1258
  %1388 = vst.msk [vmem:[%s3 + $0x8c] sm:$0xf] %vm1352, %v1259
  %1389 = vst.msk [vmem:[%s3 + $0x90] sm:$0xf] %vm1352, %v1260
  %1390 = vst.msk [vmem:[%s3 + $0x94] sm:$0xf] %vm1352, %v1261
  %1391 = vst.msk [vmem:[%s3 + $0x98] sm:$0xf] %vm1352, %v1262
  %1392 = vst.msk [vmem:[%s3 + $0x9c] sm:$0xf] %vm1352, %v1263
  %1393 = vst.msk [vmem:[%s3 + $0xa0] sm:$0xf] %vm1352, %v1264
  %1394 = vst.msk [vmem:[%s3 + $0xa4] sm:$0xf] %vm1352, %v1265
  %1395 = vst.msk [vmem:[%s3 + $0xa8] sm:$0xf] %vm1352, %v1266
  %1396 = vst.msk [vmem:[%s3 + $0xac] sm:$0xf] %vm1352, %v1267
  %1397 = vst.msk [vmem:[%s3 + $0xb0] sm:$0xf] %vm1352, %v1268
  %1398 = vst.msk [vmem:[%s3 + $0xb4] sm:$0xf] %vm1352, %v1269
  %1399 = vst.msk [vmem:[%s3 + $0xb8] sm:$0xf] %vm1352, %v1270
  %1400 = vst.msk [vmem:[%s3 + $0xbc] sm:$0xf] %vm1352, %v1271
  %1401 = vst.msk [vmem:[%s3 + $0xc0] sm:$0xf] %vm1352, %v1272
  %1402 = vst.msk [vmem:[%s3 + $0xc4] sm:$0xf] %vm1352, %v1273
  %1403 = vst.msk [vmem:[%s3 + $0xc8] sm:$0xf] %vm1352, %v1274
  %1404 = vst.msk [vmem:[%s3 + $0xcc] sm:$0xf] %vm1352, %v1275
  %1405 = vst.msk [vmem:[%s3 + $0xd0] sm:$0xf] %vm1352, %v1276
  %1406 = vst.msk [vmem:[%s3 + $0xd4] sm:$0xf] %vm1352, %v1277
  %1407 = vst.msk [vmem:[%s3 + $0xd8] sm:$0xf] %vm1352, %v1278
  %1408 = vst.msk [vmem:[%s3 + $0xdc] sm:$0xf] %vm1352, %v1279
  %1409 = vst.msk [vmem:[%s3 + $0xe0] sm:$0xf] %vm1352, %v1280
  %1410 = vst.msk [vmem:[%s3 + $0xe4] sm:$0xf] %vm1352, %v1281
  %1411 = vst.msk [vmem:[%s3 + $0xe8] sm:$0xf] %vm1352, %v1282
  %1412 = vst.msk [vmem:[%s3 + $0xec] sm:$0xf] %vm1352, %v1283
  %1413 = vst.msk [vmem:[%s3 + $0xf0] sm:$0xf] %vm1352, %v1284
  %1414 = vst.msk [vmem:[%s3 + $0xf4] sm:$0xf] %vm1352, %v1285
  %1415 = vst.msk [vmem:[%s3 + $0xf8] sm:$0xf] %vm1352, %v1286
  %1416 = vst.msk [vmem:[%s3 + $0xfc] sm:$0xf] %vm1352, %v1287
  // Predicated region
  $region14: #{tpu_custom_call.1} parent=0 // pred_check
    _
  $region15: #{tpu_custom_call.1} parent=0 // pred_check_branch
    %1418 = sbr.rel (0) target = $region17
  $region16: #{tpu_custom_call.1} parent=0 // pred_region
    _
  $region17: #{tpu_custom_call.1} parent=0 // pred_fallthru
    _
  // Predicated region
  $region18: #{tpu_custom_call.1} parent=0 // pred_check
    _
  $region19: #{tpu_custom_call.1} parent=0 // pred_check_branch
    %1420 = sbr.rel (0) target = $region21
  $region20: #{tpu_custom_call.1} parent=0 // pred_region
    _
  $region21: #{tpu_custom_call.1} parent=0 // pred_fallthru
    _

</llo_original>
